<compile_context>
chip_gen: v7x
topology: tpu7x:2x2x1
jax: 0.10.0
libtpu: 0.0.40
codegen_flags: <defaults>
</compile_context>

<pallas_src>
import functools

import jax
import jax.numpy as jnp
from jax.experimental import pallas as pl
from jax.experimental.pallas import tpu as pltpu


def _round_up(x, m):
    return ((x + m - 1) // m) * m


def _orthogonal(key, shape, gain=1.0, dtype=jnp.float32):
    """Deterministic orthogonal init (QR of a gaussian), matching nn.init.orthogonal_ semantics."""
    rows, cols = shape
    n = max(rows, cols)
    a = jax.random.normal(key, (n, n), dtype=jnp.float32)
    q, r = jnp.linalg.qr(a)
    q = q * jnp.sign(jnp.diag(r))[None, :]  # sign convention -> unique decomposition
    return (gain * q[:rows, :cols]).astype(dtype)


def actor_mlp_kernel(x_ref, w1_ref, b1_ref, w2_ref, b2_ref, w3_ref, b3_ref, o_ref):
    # x / weights are bf16 (MXU-native); accumulate in f32; do tanh/exp/softmax in f32.
    x = x_ref[...]                                                      # (TB, obs_dim) bf16
    h1 = jnp.tanh(
        jnp.dot(x, w1_ref[...], preferred_element_type=jnp.float32) + b1_ref[...]
    )
    h2 = jnp.tanh(
        jnp.dot(h1.astype(jnp.bfloat16), w2_ref[...],
                preferred_element_type=jnp.float32) + b2_ref[...]
    )
    logits = (
        jnp.dot(h2.astype(jnp.bfloat16), w3_ref[...],
                preferred_element_type=jnp.float32) + b3_ref[...]
    )                                                                   # (TB, 128) f32
    # numerically-stable softmax over the (lane-padded) action axis; padded lanes have
    # bias -1e30 so their exp underflows to exactly 0 and they contribute nothing.
    m = jnp.max(logits, axis=-1, keepdims=True)
    e = jnp.exp(logits - m)
    denom = jnp.sum(e, axis=-1, keepdims=True)
    o_ref[...] = e * pl.reciprocal(denom, approx=True)                  # EUP vrcp, lane-dense store


@functools.partial(jax.jit, static_argnames=("block_batch",))
def actor_mlp_forward(obs, w1, b1, w2, b2, w3, b3, *, block_batch=512):
    batch, obs_dim = obs.shape
    hidden_dim = w1.shape[1]
    action_dim = w3.shape[1]

    # ---- lane-dense padded fc3: width -> multiple of 128, padding lanes get bias -1e30 ----
    padded_n = max(128, _round_up(action_dim, 128))
    w3p = jnp.zeros((hidden_dim, padded_n), jnp.bfloat16)
    w3p = w3p.at[:, :action_dim].set(w3.astype(jnp.bfloat16))
    b3p = jnp.full((1, padded_n), -1e30, jnp.float32)
    b3p = b3p.at[:, :action_dim].set(b3.reshape(1, -1).astype(jnp.float32))

    # ---- batch tiling: TB multiple of 8 (sublane), default 512 (multiple of 256 for v6e/v7x MXU) ----
    tb = min(block_batch, _round_up(batch, 8))
    padded_batch = _round_up(batch, tb)
    x = obs.astype(jnp.bfloat16)
    if padded_batch != batch:
        x = jnp.pad(x, ((0, padded_batch - batch), (0, 0)))  # zero rows -> finite garbage, discarded

    const2 = lambda i: (0, 0)  # parameters: same block every grid step -> stay VMEM-resident

    out = pl.pallas_call(
        actor_mlp_kernel,
        out_shape=jax.ShapeDtypeStruct((padded_batch, padded_n), jnp.float32),
        grid=(padded_batch // tb,),
        in_specs=[
            pl.BlockSpec((tb, obs_dim), lambda i: (i, 0)),          # activations: pipelined per tile
            pl.BlockSpec((obs_dim, hidden_dim), const2),            # W1 (bf16)
            pl.BlockSpec((1, hidden_dim), const2),                  # b1 (f32)
            pl.BlockSpec((hidden_dim, hidden_dim), const2),         # W2 (bf16)
            pl.BlockSpec((1, hidden_dim), const2),                  # b2 (f32)
            pl.BlockSpec((hidden_dim, padded_n), const2),           # W3 padded (bf16)
            pl.BlockSpec((1, padded_n), const2),                    # b3 padded (f32)
        ],
        out_specs=pl.BlockSpec((tb, padded_n), lambda i: (i, 0)),
        compiler_params=pltpu.CompilerParams(
            dimension_semantics=("parallel",),                      # megacore split on v7x
        ),
    )(
        x,
        w1.astype(jnp.bfloat16),
        b1.reshape(1, -1).astype(jnp.float32),
        w2.astype(jnp.bfloat16),
        b2.reshape(1, -1).astype(jnp.float32),
        w3p,
        b3p,
    )
    return out[:batch, :action_dim]


def reference_forward(obs, w1, b1, w2, b2, w3, b3):
    h1 = jnp.tanh(obs @ w1 + b1)
    h2 = jnp.tanh(h1 @ w2 + b2)
    return jax.nn.softmax(h2 @ w3 + b3, axis=-1)


if __name__ == "__main__":
    # Shapes consistent with the module: obs_dim=16, hidden_dim=64, action_dim=4.
    # batch=1000 exercises the batch grid (tile=512 -> padded to 1024, grid=(2,)) and edge padding.
    batch, obs_dim, hidden_dim, action_dim = 1000, 16, 64, 4

    key = jax.random.PRNGKey(0)
    k_obs, k1, k2, k3 = jax.random.split(key, 4)

    obs = jax.random.normal(k_obs, (batch, obs_dim), dtype=jnp.float32)

    # orthogonal_init: weights orthogonal (gain 1.0, 1.0, 0.01), biases zero
    w1 = _orthogonal(k1, (obs_dim, hidden_dim), gain=1.0)
    b1 = jnp.zeros((1, hidden_dim), dtype=jnp.float32)
    w2 = _orthogonal(k2, (hidden_dim, hidden_dim), gain=1.0)
    b2 = jnp.zeros((1, hidden_dim), dtype=jnp.float32)
    w3 = _orthogonal(k3, (hidden_dim, action_dim), gain=0.01)
    b3 = jnp.zeros((1, action_dim), dtype=jnp.float32)

    out = actor_mlp_forward(obs, w1, b1, w2, b2, w3, b3)
    out = jax.block_until_ready(out)

    ref = reference_forward(obs, w1, b1, w2, b2, w3, b3)
    assert out.shape == (batch, action_dim), out.shape
    # bf16 MXU inputs + approx reciprocal -> compare to the f32 reference with a relaxed tolerance.
    assert jnp.allclose(out, ref, atol=5e-3, rtol=5e-3), "kernel mismatch vs reference"
    assert jnp.allclose(jnp.sum(out, axis=-1), 1.0, atol=2e-3), "softmax rows must sum to ~1"
    assert bool(jnp.all(jnp.isfinite(out))), "non-finite probabilities"

    print("KERNEL_OK")
</pallas_src>

<mosaic_0001>
module attributes {stable_mosaic.version = 11 : i64} {
  func.func @actor_mlp_kernel(%arg0: i32, %arg1: memref<512x16xbf16, #tpu.memory_space<vmem>>, %arg2: memref<16x64xbf16, #tpu.memory_space<vmem>>, %arg3: memref<1x64xf32, #tpu.memory_space<vmem>>, %arg4: memref<64x64xbf16, #tpu.memory_space<vmem>>, %arg5: memref<1x64xf32, #tpu.memory_space<vmem>>, %arg6: memref<64x128xbf16, #tpu.memory_space<vmem>>, %arg7: memref<1x128xf32, #tpu.memory_space<vmem>>, %arg8: memref<512x128xf32, #tpu.memory_space<vmem>>) attributes {dimension_semantics = [#tpu.dimension_semantics<parallel>], iteration_bounds = array<i64: 2>, scalar_prefetch = 0 : i64, scratch_operands = 0 : i64, tpu.core_type = #tpu.core_type<tc>, window_params = [{transform_indices = @transform_0, window_bounds = array<i64: 512, 16>}, {pipeline_mode = #tpu.pipeline_mode<synchronous>, transform_indices = @transform_1, window_bounds = array<i64: 16, 64>}, {pipeline_mode = #tpu.pipeline_mode<synchronous>, transform_indices = @transform_2, window_bounds = array<i64: 1, 64>}, {pipeline_mode = #tpu.pipeline_mode<synchronous>, transform_indices = @transform_3, window_bounds = array<i64: 64, 64>}, {pipeline_mode = #tpu.pipeline_mode<synchronous>, transform_indices = @transform_4, window_bounds = array<i64: 1, 64>}, {pipeline_mode = #tpu.pipeline_mode<synchronous>, transform_indices = @transform_5, window_bounds = array<i64: 64, 128>}, {pipeline_mode = #tpu.pipeline_mode<synchronous>, transform_indices = @transform_6, window_bounds = array<i64: 1, 128>}, {transform_indices = @transform_7, window_bounds = array<i64: 512, 128>}]} {
    %c0 = arith.constant 0 : index
    %c0_0 = arith.constant 0 : index
    %0 = vector.load %arg1[%c0, %c0_0] : memref<512x16xbf16, #tpu.memory_space<vmem>>, vector<512x16xbf16>
    %c0_1 = arith.constant 0 : index
    %c0_2 = arith.constant 0 : index
    %1 = vector.load %arg2[%c0_1, %c0_2] : memref<16x64xbf16, #tpu.memory_space<vmem>>, vector<16x64xbf16>
    %cst = arith.constant dense<0.000000e+00> : vector<512x64xf32>
    %2 = tpu.matmul %0, %1, %cst {dimension_numbers = #tpu.dot_dimension_numbers<[1], [0], [0], [1], [0, 0, 1, 1], [], []>} : vector<512x16xbf16>, vector<16x64xbf16>, vector<512x64xf32> -> vector<512x64xf32>
    %c0_3 = arith.constant 0 : index
    %c0_4 = arith.constant 0 : index
    %3 = vector.load %arg3[%c0_3, %c0_4] : memref<1x64xf32, #tpu.memory_space<vmem>>, vector<1x64xf32>
    %4 = vector.broadcast %3 : vector<1x64xf32> to vector<512x64xf32>
    %5 = arith.addf %2, %4 : vector<512x64xf32>
    %6 = math.tanh %5 : vector<512x64xf32>
    %7 = arith.truncf %6 : vector<512x64xf32> to vector<512x64xbf16>
    %c0_5 = arith.constant 0 : index
    %c0_6 = arith.constant 0 : index
    %8 = vector.load %arg4[%c0_5, %c0_6] : memref<64x64xbf16, #tpu.memory_space<vmem>>, vector<64x64xbf16>
    %cst_7 = arith.constant dense<0.000000e+00> : vector<512x64xf32>
    %9 = tpu.matmul %7, %8, %cst_7 {dimension_numbers = #tpu.dot_dimension_numbers<[1], [0], [0], [1], [0, 0, 1, 1], [], []>} : vector<512x64xbf16>, vector<64x64xbf16>, vector<512x64xf32> -> vector<512x64xf32>
    %c0_8 = arith.constant 0 : index
    %c0_9 = arith.constant 0 : index
    %10 = vector.load %arg5[%c0_8, %c0_9] : memref<1x64xf32, #tpu.memory_space<vmem>>, vector<1x64xf32>
    %11 = vector.broadcast %10 : vector<1x64xf32> to vector<512x64xf32>
    %12 = arith.addf %9, %11 : vector<512x64xf32>
    %13 = math.tanh %12 : vector<512x64xf32>
    %14 = arith.truncf %13 : vector<512x64xf32> to vector<512x64xbf16>
    %c0_10 = arith.constant 0 : index
    %c0_11 = arith.constant 0 : index
    %15 = vector.load %arg6[%c0_10, %c0_11] : memref<64x128xbf16, #tpu.memory_space<vmem>>, vector<64x128xbf16>
    %cst_12 = arith.constant dense<0.000000e+00> : vector<512x128xf32>
    %16 = tpu.matmul %14, %15, %cst_12 {dimension_numbers = #tpu.dot_dimension_numbers<[1], [0], [0], [1], [0, 0, 1, 1], [], []>} : vector<512x64xbf16>, vector<64x128xbf16>, vector<512x128xf32> -> vector<512x128xf32>
    %c0_13 = arith.constant 0 : index
    %c0_14 = arith.constant 0 : index
    %17 = vector.load %arg7[%c0_13, %c0_14] : memref<1x128xf32, #tpu.memory_space<vmem>>, vector<1x128xf32>
    %18 = vector.broadcast %17 : vector<1x128xf32> to vector<512x128xf32>
    %19 = arith.addf %16, %18 : vector<512x128xf32>
    %cst_15 = arith.constant dense<0xFF800000> : vector<512xf32>
    %20 = vector.multi_reduction <maximumf>, %19, %cst_15 [1] : vector<512x128xf32> to vector<512xf32>
    %21 = vector.shape_cast %20 : vector<512xf32> to vector<512x1xf32>
    %22 = vector.broadcast %21 : vector<512x1xf32> to vector<512x128xf32>
    %23 = arith.subf %19, %22 : vector<512x128xf32>
    %24 = math.exp %23 : vector<512x128xf32>
    %cst_16 = arith.constant dense<0.000000e+00> : vector<512xf32>
    %25 = vector.multi_reduction <add>, %24, %cst_16 [1] : vector<512x128xf32> to vector<512xf32>
    %26 = vector.shape_cast %25 : vector<512xf32> to vector<512x1xf32>
    %27 = tpu.reciprocal %26 {approx = true} : vector<512x1xf32> -> vector<512x1xf32>
    %28 = vector.broadcast %27 : vector<512x1xf32> to vector<512x128xf32>
    %29 = arith.mulf %24, %28 : vector<512x128xf32>
    %c0_17 = arith.constant 0 : index
    %c0_18 = arith.constant 0 : index
    %30 = vector.load %arg8[%c0_17, %c0_18] : memref<512x128xf32, #tpu.memory_space<vmem>>, vector<512x128xf32>
    tpu.vector_store %arg8[%c0_17, %c0_18], %29 {strides = array<i32>} : memref<512x128xf32, #tpu.memory_space<vmem>>, vector<512x128xf32>,
    return
  }
  func.func @transform_0(%arg0: i32) -> (i32, i32) {
    %c0_i32 = arith.constant 0 : i32
    %c0_i32_0 = arith.constant 0 : i32
    return %arg0, %c0_i32 : i32, i32
  }
  func.func @transform_1(%arg0: i32) -> (i32, i32) {
    %c0_i32 = arith.constant 0 : i32
    %c0_i32_0 = arith.constant 0 : i32
    %c0_i32_1 = arith.constant 0 : i32
    return %c0_i32, %c0_i32_0 : i32, i32
  }
  func.func @transform_2(%arg0: i32) -> (i32, i32) {
    %c0_i32 = arith.constant 0 : i32
    %c0_i32_0 = arith.constant 0 : i32
    %c0_i32_1 = arith.constant 0 : i32
    return %c0_i32, %c0_i32_0 : i32, i32
  }
  func.func @transform_3(%arg0: i32) -> (i32, i32) {
    %c0_i32 = arith.constant 0 : i32
    %c0_i32_0 = arith.constant 0 : i32
    %c0_i32_1 = arith.constant 0 : i32
    return %c0_i32, %c0_i32_0 : i32, i32
  }
  func.func @transform_4(%arg0: i32) -> (i32, i32) {
    %c0_i32 = arith.constant 0 : i32
    %c0_i32_0 = arith.constant 0 : i32
    %c0_i32_1 = arith.constant 0 : i32
    return %c0_i32, %c0_i32_0 : i32, i32
  }
  func.func @transform_5(%arg0: i32) -> (i32, i32) {
    %c0_i32 = arith.constant 0 : i32
    %c0_i32_0 = arith.constant 0 : i32
    %c0_i32_1 = arith.constant 0 : i32
    return %c0_i32, %c0_i32_0 : i32, i32
  }
  func.func @transform_6(%arg0: i32) -> (i32, i32) {
    %c0_i32 = arith.constant 0 : i32
    %c0_i32_0 = arith.constant 0 : i32
    %c0_i32_1 = arith.constant 0 : i32
    return %c0_i32, %c0_i32_0 : i32, i32
  }
  func.func @transform_7(%arg0: i32) -> (i32, i32) {
    %c0_i32 = arith.constant 0 : i32
    %c0_i32_0 = arith.constant 0 : i32
    return %arg0, %c0_i32 : i32, i32
  }
}

</mosaic_0001>

<llo_original>
// kernel: actor_mlp_forward.1
$region0: #{actor_mlp_forward.1}
  #allocation0 [shape = 'u32[]', space=smem, size = 0x4, offset = 0x4, fixed_abs, tag = 'smem constant byte address 0x4 - core index']
  #allocation1 [shape = 'u32[144,128]{1,0:T(1,128)}', space=vmem, size = 0x12000, scoped, tag = 'internal scratch']
  %s0 = inlined_call_operand.vmem [shape: bf16[1024,16], index: 0, kind: input, shape index: {}]
  %s1 = inlined_call_operand.vmem [shape: bf16[16,64], index: 1, kind: input, shape index: {}]
  %s2 = inlined_call_operand.vmem [shape: f32[1,64], index: 2, kind: input, shape index: {}]
  %s3 = inlined_call_operand.vmem [shape: bf16[64,64], index: 3, kind: input, shape index: {}]
  %s4 = inlined_call_operand.vmem [shape: f32[1,64], index: 4, kind: input, shape index: {}]
  %s5 = inlined_call_operand.vmem [shape: bf16[64,128], index: 5, kind: input, shape index: {}]
  %s6 = inlined_call_operand.vmem [shape: f32[1,128], index: 6, kind: input, shape index: {}]
  %s7 = inlined_call_operand.vmem [shape: f32[1024,128], index: 7, kind: output, shape index: {}]
  %s8 = sld [smem:[#allocation0]]
  $region61: #{actor_mlp_forward.1} parent=0
    _
  %s10 = ssub.s32 1, %s8
  %s11 = scalar_select 0, %s10, %s8
  loop: start=0, step=1, limit=4
  $region2: #{actor_mlp_forward.1} parent=0 // loop_pre_header
    _
  $region3: #{actor_mlp_forward.1} parent=0 // loop_header
    %s13 = sphi 0, %s17
    %p14 = scmp.ge.s32.totalorder %s13, 4
    %s23 = sphi 0, %s25
    %s26 = sphi 0, %s23
    %s27 = sphi 0, %s26
    %s43 = sphi 0, %s27
    %s47 = sphi 0, %s47
    %s49 = sphi 0, %s47
    %s50 = sphi 0, %s49
    %s64 = sphi 0, %s50
    %s68 = sphi 0, %s68
    %s70 = sphi 0, %s68
    %s71 = sphi 0, %s70
    %s85 = sphi 0, %s71
    %s89 = sphi 0, %s89
    %s91 = sphi 0, %s89
    %s92 = sphi 0, %s91
    %s106 = sphi 0, %s92
    %s110 = sphi 0, %s110
    %s112 = sphi 0, %s110
    %s113 = sphi 0, %s112
    %s127 = sphi 0, %s113
    %s131 = sphi 0, %s131
    %s133 = sphi 0, %s131
    %s134 = sphi 0, %s133
    %s148 = sphi 0, %s134
    %s152 = sphi 0, %s152
    %s154 = sphi 0, %s152
    %s155 = sphi 0, %s154
    %s169 = sphi 0, %s155
    %s175 = sphi 0, %s177
    %s178 = sphi 0, %s175
    %s179 = sphi 0, %s178
    %s195 = sphi 0, %s179
  $region4: #{actor_mlp_forward.1} parent=0 // loop_header_branch
    %16 = sbr.rel (%p14) target = $region8
  $region5: #{actor_mlp_forward.1} parent=0 // loop_body
    %s18 = ssub.s32 %s13, 1
    %s19 = ssub.s32 %s13, 2
    %s20 = sadd.s32 %s13, 1
    %s21 = ssub.s32 %s13, %s20
    %p22 = scmp.eq.s32.totalorder %s21, 0
    %s24 = sadd.s32 %s23, 1
    %s25 = scalar_select %p22, %s23, %s24
    %p28 = pneg %p22
    %p29 = scmp.eq.s32.totalorder %s13, 1
    %p30 = por %p28, %p29
    %p31 = scmp.ne.s32.totalorder %s23, %s26
    %p32 = scmp.eq.s32.totalorder %s13, 0
    %p33 = por %p31, %p32
    %p34 = scmp.ne.s32.totalorder %s23, %s26
    %p35 = scmp.eq.s32.totalorder %s18, 1
    %p36 = por %p34, %p35
    %p37 = scmp.ne.s32.totalorder %s26, %s27
    %p38 = scmp.eq.s32.totalorder %s18, 0
    %p39 = por %p37, %p38
    %p40 = scmp.ne.s32.totalorder %s26, %s27
    %p41 = scmp.eq.s32.totalorder %s19, 1
    %p42 = por %p40, %p41
    %p44 = scmp.ne.s32.totalorder %s27, %s43
    %p45 = scmp.eq.s32.totalorder %s19, 0
    %p46 = por %p44, %p45
    %s48 = sadd.s32 %s47, 1
    %p51 = scmp.eq.s32.totalorder %s13, 1
    %p52 = scmp.ne.s32.totalorder %s47, %s49
    %p53 = scmp.eq.s32.totalorder %s13, 0
    %p54 = por %p52, %p53
    %p55 = scmp.ne.s32.totalorder %s47, %s49
    %p56 = scmp.eq.s32.totalorder %s18, 1
    %p57 = por %p55, %p56
    %p58 = scmp.ne.s32.totalorder %s49, %s50
    %p59 = scmp.eq.s32.totalorder %s18, 0
    %p60 = por %p58, %p59
    %p61 = scmp.ne.s32.totalorder %s49, %s50
    %p62 = scmp.eq.s32.totalorder %s19, 1
    %p63 = por %p61, %p62
    %p65 = scmp.ne.s32.totalorder %s50, %s64
    %p66 = scmp.eq.s32.totalorder %s19, 0
    %p67 = por %p65, %p66
    %s69 = sadd.s32 %s68, 1
    %p72 = scmp.eq.s32.totalorder %s13, 1
    %p73 = scmp.ne.s32.totalorder %s68, %s70
    %p74 = scmp.eq.s32.totalorder %s13, 0
    %p75 = por %p73, %p74
    %p76 = scmp.ne.s32.totalorder %s68, %s70
    %p77 = scmp.eq.s32.totalorder %s18, 1
    %p78 = por %p76, %p77
    %p79 = scmp.ne.s32.totalorder %s70, %s71
    %p80 = scmp.eq.s32.totalorder %s18, 0
    %p81 = por %p79, %p80
    %p82 = scmp.ne.s32.totalorder %s70, %s71
    %p83 = scmp.eq.s32.totalorder %s19, 1
    %p84 = por %p82, %p83
    %p86 = scmp.ne.s32.totalorder %s71, %s85
    %p87 = scmp.eq.s32.totalorder %s19, 0
    %p88 = por %p86, %p87
    %s90 = sadd.s32 %s89, 1
    %p93 = scmp.eq.s32.totalorder %s13, 1
    %p94 = scmp.ne.s32.totalorder %s89, %s91
    %p95 = scmp.eq.s32.totalorder %s13, 0
    %p96 = por %p94, %p95
    %p97 = scmp.ne.s32.totalorder %s89, %s91
    %p98 = scmp.eq.s32.totalorder %s18, 1
    %p99 = por %p97, %p98
    %p100 = scmp.ne.s32.totalorder %s91, %s92
    %p101 = scmp.eq.s32.totalorder %s18, 0
    %p102 = por %p100, %p101
    %p103 = scmp.ne.s32.totalorder %s91, %s92
    %p104 = scmp.eq.s32.totalorder %s19, 1
    %p105 = por %p103, %p104
    %p107 = scmp.ne.s32.totalorder %s92, %s106
    %p108 = scmp.eq.s32.totalorder %s19, 0
    %p109 = por %p107, %p108
    %s111 = sadd.s32 %s110, 1
    %p114 = scmp.eq.s32.totalorder %s13, 1
    %p115 = scmp.ne.s32.totalorder %s110, %s112
    %p116 = scmp.eq.s32.totalorder %s13, 0
    %p117 = por %p115, %p116
    %p118 = scmp.ne.s32.totalorder %s110, %s112
    %p119 = scmp.eq.s32.totalorder %s18, 1
    %p120 = por %p118, %p119
    %p121 = scmp.ne.s32.totalorder %s112, %s113
    %p122 = scmp.eq.s32.totalorder %s18, 0
    %p123 = por %p121, %p122
    %p124 = scmp.ne.s32.totalorder %s112, %s113
    %p125 = scmp.eq.s32.totalorder %s19, 1
    %p126 = por %p124, %p125
    %p128 = scmp.ne.s32.totalorder %s113, %s127
    %p129 = scmp.eq.s32.totalorder %s19, 0
    %p130 = por %p128, %p129
    %s132 = sadd.s32 %s131, 1
    %p135 = scmp.eq.s32.totalorder %s13, 1
    %p136 = scmp.ne.s32.totalorder %s131, %s133
    %p137 = scmp.eq.s32.totalorder %s13, 0
    %p138 = por %p136, %p137
    %p139 = scmp.ne.s32.totalorder %s131, %s133
    %p140 = scmp.eq.s32.totalorder %s18, 1
    %p141 = por %p139, %p140
    %p142 = scmp.ne.s32.totalorder %s133, %s134
    %p143 = scmp.eq.s32.totalorder %s18, 0
    %p144 = por %p142, %p143
    %p145 = scmp.ne.s32.totalorder %s133, %s134
    %p146 = scmp.eq.s32.totalorder %s19, 1
    %p147 = por %p145, %p146
    %p149 = scmp.ne.s32.totalorder %s134, %s148
    %p150 = scmp.eq.s32.totalorder %s19, 0
    %p151 = por %p149, %p150
    %s153 = sadd.s32 %s152, 1
    %p156 = scmp.eq.s32.totalorder %s13, 1
    %p157 = scmp.ne.s32.totalorder %s152, %s154
    %p158 = scmp.eq.s32.totalorder %s13, 0
    %p159 = por %p157, %p158
    %p160 = scmp.ne.s32.totalorder %s152, %s154
    %p161 = scmp.eq.s32.totalorder %s18, 1
    %p162 = por %p160, %p161
    %p163 = scmp.ne.s32.totalorder %s154, %s155
    %p164 = scmp.eq.s32.totalorder %s18, 0
    %p165 = por %p163, %p164
    %p166 = scmp.ne.s32.totalorder %s154, %s155
    %p167 = scmp.eq.s32.totalorder %s19, 1
    %p168 = por %p166, %p167
    %p170 = scmp.ne.s32.totalorder %s155, %s169
    %p171 = scmp.eq.s32.totalorder %s19, 0
    %p172 = por %p170, %p171
    %s173 = ssub.s32 %s13, %s20
    %p174 = scmp.eq.s32.totalorder %s173, 0
    %s176 = sadd.s32 %s175, 1
    %s177 = scalar_select %p174, %s175, %s176
    %p180 = pneg %p174
    %p181 = scmp.eq.s32.totalorder %s13, 1
    %p182 = por %p180, %p181
    %p183 = scmp.ne.s32.totalorder %s175, %s178
    %p184 = scmp.eq.s32.totalorder %s13, 0
    %p185 = por %p183, %p184
    %p186 = scmp.ne.s32.totalorder %s175, %s178
    %p187 = scmp.eq.s32.totalorder %s18, 1
    %p188 = por %p186, %p187
    %p189 = scmp.ne.s32.totalorder %s178, %s179
    %p190 = scmp.eq.s32.totalorder %s18, 0
    %p191 = por %p189, %p190
    %p192 = scmp.ne.s32.totalorder %s178, %s179
    %p193 = scmp.eq.s32.totalorder %s19, 1
    %p194 = por %p192, %p193
    %p196 = scmp.ne.s32.totalorder %s179, %s195
    %p197 = scmp.eq.s32.totalorder %s19, 0
    %p198 = por %p196, %p197
    %p199 = scmp.le.s32.totalorder 1, %s13
    %p200 = scmp.lt.s32.totalorder %s13, 3
    %p201 = pnand %p199, %p200
    %p202 = pneg %p201
    // Predicated region
    $region9: #{actor_mlp_forward.1} parent=5 // pred_check
      _
    $region10: #{actor_mlp_forward.1} parent=5 // pred_check_branch
      %204 = sbr.rel (%p201) target = $region12
    $region11: #{actor_mlp_forward.1} parent=5 // pred_region
      %s205 = ssub.s32 %s13, 1
      // Predicated region
      $region13: #{actor_mlp_forward.1} parent=11 // pred_check
        %p206 = pneg %p60
      $region14: #{actor_mlp_forward.1} parent=11 // pred_check_branch
        %208 = sbr.rel (%p206) target = $region16
      $region15: #{actor_mlp_forward.1} parent=11 // pred_region
        _
      $region16: #{actor_mlp_forward.1} parent=11 // pred_fallthru
        _
      // Predicated region
      $region17: #{actor_mlp_forward.1} parent=11 // pred_check
        %p209 = pneg %p81
      $region18: #{actor_mlp_forward.1} parent=11 // pred_check_branch
        %211 = sbr.rel (%p209) target = $region20
      $region19: #{actor_mlp_forward.1} parent=11 // pred_region
        _
      $region20: #{actor_mlp_forward.1} parent=11 // pred_fallthru
        _
      // Predicated region
      $region21: #{actor_mlp_forward.1} parent=11 // pred_check
        %p212 = pneg %p102
      $region22: #{actor_mlp_forward.1} parent=11 // pred_check_branch
        %214 = sbr.rel (%p212) target = $region24
      $region23: #{actor_mlp_forward.1} parent=11 // pred_region
        _
      $region24: #{actor_mlp_forward.1} parent=11 // pred_fallthru
        _
      // Predicated region
      $region25: #{actor_mlp_forward.1} parent=11 // pred_check
        %p215 = pneg %p123
      $region26: #{actor_mlp_forward.1} parent=11 // pred_check_branch
        %217 = sbr.rel (%p215) target = $region28
      $region27: #{actor_mlp_forward.1} parent=11 // pred_region
        _
      $region28: #{actor_mlp_forward.1} parent=11 // pred_fallthru
        _
      // Predicated region
      $region29: #{actor_mlp_forward.1} parent=11 // pred_check
        %p218 = pneg %p144
      $region30: #{actor_mlp_forward.1} parent=11 // pred_check_branch
        %220 = sbr.rel (%p218) target = $region32
      $region31: #{actor_mlp_forward.1} parent=11 // pred_region
        _
      $region32: #{actor_mlp_forward.1} parent=11 // pred_fallthru
        _
      // Predicated region
      $region33: #{actor_mlp_forward.1} parent=11 // pred_check
        %p221 = pneg %p165
      $region34: #{actor_mlp_forward.1} parent=11 // pred_check_branch
        %223 = sbr.rel (%p221) target = $region36
      $region35: #{actor_mlp_forward.1} parent=11 // pred_region
        _
      $region36: #{actor_mlp_forward.1} parent=11 // pred_fallthru
        _
    $region12: #{actor_mlp_forward.1} parent=5 // pred_fallthru
      _
    %p224 = scmp.lt.s32.totalorder %s13, 2
    // Predicated region
    $region37: #{actor_mlp_forward.1} parent=5 // pred_check
      %p225 = pneg %p224
    $region38: #{actor_mlp_forward.1} parent=5 // pred_check_branch
      %227 = sbr.rel (%p225) target = $region40
    $region39: #{actor_mlp_forward.1} parent=5 // pred_region
      // Predicated region
      $region41: #{actor_mlp_forward.1} parent=39 // pred_check
        %p228 = pneg %p33
      $region42: #{actor_mlp_forward.1} parent=39 // pred_check_branch
        %230 = sbr.rel (%p228) target = $region44
      $region43: #{actor_mlp_forward.1} parent=39 // pred_region
        %s231 = smul.u32 64, %s13
        %p232 = scmp.lt.s32.totalorder %s231, 127
        %s233 = scalar_select %p232, %s231, 127
        %s234 = smul.addr %s233, 4
        %s235 = scalar_lea.vmem %s0, %s234
        %s236 = smul.u32 64, %s13
      $region44: #{actor_mlp_forward.1} parent=39 // pred_fallthru
        _
    $region40: #{actor_mlp_forward.1} parent=5 // pred_fallthru
      _
    %p237 = scmp.le.s32.totalorder 1, %s13
    %p238 = scmp.lt.s32.totalorder %s13, 3
    %p239 = pnand %p237, %p238
    %p240 = pneg %p239
    // Predicated region
    $region45: #{actor_mlp_forward.1} parent=5 // pred_check
      _
    $region46: #{actor_mlp_forward.1} parent=5 // pred_check_branch
      %242 = sbr.rel (%p239) target = $region48
    $region47: #{actor_mlp_forward.1} parent=5 // pred_region
      %s243 = ssub.s32 %s13, 1
      %s244 = smul.u32 64, %s18
      %p245 = scmp.lt.s32.totalorder %s244, 127
      %s246 = scalar_select %p245, %s244, 127
      %s247 = smul.addr %s246, 4
      %s248 = scalar_lea.vmem %s0, %s247
      %p249 = pneg %p39
      %p250 = pneg %p36
      %p251 = pneg %p60
      %p252 = pneg %p57
      %p253 = pneg %p81
      %p254 = pneg %p78
      %p255 = pneg %p102
      %p256 = pneg %p99
      %p257 = pneg %p123
      %p258 = pneg %p120
      %p259 = pneg %p144
      %p260 = pneg %p141
      %p261 = pneg %p165
      %p262 = pneg %p162
      %p263 = pneg %p191
      %p264 = pneg %p188
      %s265 = smul.u32 64, %s18
      %p266 = scmp.lt.s32.totalorder %s265, 127
      %s267 = scalar_select %p266, %s265, 127
      %s268 = smul.addr %s267, 8
      %s269 = scalar_lea.vmem %s7, %s268
      %s270 = smul.u32 64, %s18
      %p271 = scmp.lt.s32.totalorder %s270, 127
      %s272 = scalar_select %p271, %s270, 127
      %s273 = smul.addr %s272, 4
      %s274 = scalar_lea.vmem %s0, %s273
      %s275 = smul.u32 64, %s18
      %s276 = smul.u32 64, %s18
      %p277 = scmp.lt.s32.totalorder %s276, 127
      %s278 = scalar_select %p277, %s276, 127
      %s279 = smul.addr %s278, 8
      %s280 = scalar_lea.vmem %s7, %s279
      %s281 = smul.u32 64, %s18
      %v283 = vld [vmem:[%s274] sm:$0xf]
      %v284 = vld [vmem:[%s274 + $0x4] sm:$0xf]
      %v285 = vld [vmem:[%s274 + $0x8] sm:$0xf]
      %v286 = vld [vmem:[%s274 + $0xc] sm:$0xf]
      %v287 = vld [vmem:[%s274 + $0x10] sm:$0xf]
      %v288 = vld [vmem:[%s274 + $0x14] sm:$0xf]
      %v289 = vld [vmem:[%s274 + $0x18] sm:$0xf]
      %v290 = vld [vmem:[%s274 + $0x1c] sm:$0xf]
      %v291 = vld [vmem:[%s274 + $0x20] sm:$0xf]
      %v292 = vld [vmem:[%s274 + $0x24] sm:$0xf]
      %v293 = vld [vmem:[%s274 + $0x28] sm:$0xf]
      %v294 = vld [vmem:[%s274 + $0x2c] sm:$0xf]
      %v295 = vld [vmem:[%s274 + $0x30] sm:$0xf]
      %v296 = vld [vmem:[%s274 + $0x34] sm:$0xf]
      %v297 = vld [vmem:[%s274 + $0x38] sm:$0xf]
      %v298 = vld [vmem:[%s274 + $0x3c] sm:$0xf]
      %v299 = vld [vmem:[%s274 + $0x40] sm:$0xf]
      %v300 = vld [vmem:[%s274 + $0x44] sm:$0xf]
      %v301 = vld [vmem:[%s274 + $0x48] sm:$0xf]
      %v302 = vld [vmem:[%s274 + $0x4c] sm:$0xf]
      %v303 = vld [vmem:[%s274 + $0x50] sm:$0xf]
      %v304 = vld [vmem:[%s274 + $0x54] sm:$0xf]
      %v305 = vld [vmem:[%s274 + $0x58] sm:$0xf]
      %v306 = vld [vmem:[%s274 + $0x5c] sm:$0xf]
      %v307 = vld [vmem:[%s274 + $0x60] sm:$0xf]
      %v308 = vld [vmem:[%s274 + $0x64] sm:$0xf]
      %v309 = vld [vmem:[%s274 + $0x68] sm:$0xf]
      %v310 = vld [vmem:[%s274 + $0x6c] sm:$0xf]
      %v311 = vld [vmem:[%s274 + $0x70] sm:$0xf]
      %v312 = vld [vmem:[%s274 + $0x74] sm:$0xf]
      %v313 = vld [vmem:[%s274 + $0x78] sm:$0xf]
      %v314 = vld [vmem:[%s274 + $0x7c] sm:$0xf]
      %v315 = vld [vmem:[%s274 + $0x80] sm:$0xf]
      %v316 = vld [vmem:[%s274 + $0x84] sm:$0xf]
      %v317 = vld [vmem:[%s274 + $0x88] sm:$0xf]
      %v318 = vld [vmem:[%s274 + $0x8c] sm:$0xf]
      %v319 = vld [vmem:[%s274 + $0x90] sm:$0xf]
      %v320 = vld [vmem:[%s274 + $0x94] sm:$0xf]
      %v321 = vld [vmem:[%s274 + $0x98] sm:$0xf]
      %v322 = vld [vmem:[%s274 + $0x9c] sm:$0xf]
      %v323 = vld [vmem:[%s274 + $0xa0] sm:$0xf]
      %v324 = vld [vmem:[%s274 + $0xa4] sm:$0xf]
      %v325 = vld [vmem:[%s274 + $0xa8] sm:$0xf]
      %v326 = vld [vmem:[%s274 + $0xac] sm:$0xf]
      %v327 = vld [vmem:[%s274 + $0xb0] sm:$0xf]
      %v328 = vld [vmem:[%s274 + $0xb4] sm:$0xf]
      %v329 = vld [vmem:[%s274 + $0xb8] sm:$0xf]
      %v330 = vld [vmem:[%s274 + $0xbc] sm:$0xf]
      %v331 = vld [vmem:[%s274 + $0xc0] sm:$0xf]
      %v332 = vld [vmem:[%s274 + $0xc4] sm:$0xf]
      %v333 = vld [vmem:[%s274 + $0xc8] sm:$0xf]
      %v334 = vld [vmem:[%s274 + $0xcc] sm:$0xf]
      %v335 = vld [vmem:[%s274 + $0xd0] sm:$0xf]
      %v336 = vld [vmem:[%s274 + $0xd4] sm:$0xf]
      %v337 = vld [vmem:[%s274 + $0xd8] sm:$0xf]
      %v338 = vld [vmem:[%s274 + $0xdc] sm:$0xf]
      %v339 = vld [vmem:[%s274 + $0xe0] sm:$0xf]
      %v340 = vld [vmem:[%s274 + $0xe4] sm:$0xf]
      %v341 = vld [vmem:[%s274 + $0xe8] sm:$0xf]
      %v342 = vld [vmem:[%s274 + $0xec] sm:$0xf]
      %v343 = vld [vmem:[%s274 + $0xf0] sm:$0xf]
      %v344 = vld [vmem:[%s274 + $0xf4] sm:$0xf]
      %v345 = vld [vmem:[%s274 + $0xf8] sm:$0xf]
      %v346 = vld [vmem:[%s274 + $0xfc] sm:$0xf]
      %v347 = vld [vmem:[%s1] sm:$0xf]
      %v348 = vld [vmem:[%s1 + $0x4] sm:$0xf]
      %v349 = vld [vmem:[%s2] sm:$0x1]
      %v351 = vlaneseq
      %v352 = vshrl.u32 %v351, 7
      %v353 = vsub.s32 0, %v352
      %v354 = vrot.slane %v349, %v353
      %v420 = vunpack.c.l.b16 %v283
      %v421 = vunpack.c.l.b16 %v284
      %v422 = vunpack.c.l.b16 %v285
      %v423 = vunpack.c.l.b16 %v286
      %v424 = vunpack.c.l.b16 %v287
      %v425 = vunpack.c.l.b16 %v288
      %v426 = vunpack.c.l.b16 %v289
      %v427 = vunpack.c.l.b16 %v290
      %v428 = vunpack.c.l.b16 %v291
      %v429 = vunpack.c.l.b16 %v292
      %v430 = vunpack.c.l.b16 %v293
      %v431 = vunpack.c.l.b16 %v294
      %v432 = vunpack.c.l.b16 %v295
      %v433 = vunpack.c.l.b16 %v296
      %v434 = vunpack.c.l.b16 %v297
      %v435 = vunpack.c.l.b16 %v298
      %v436 = vunpack.c.l.b16 %v299
      %v437 = vunpack.c.l.b16 %v300
      %v438 = vunpack.c.l.b16 %v301
      %v439 = vunpack.c.l.b16 %v302
      %v440 = vunpack.c.l.b16 %v303
      %v441 = vunpack.c.l.b16 %v304
      %v442 = vunpack.c.l.b16 %v305
      %v443 = vunpack.c.l.b16 %v306
      %v444 = vunpack.c.l.b16 %v307
      %v445 = vunpack.c.l.b16 %v308
      %v446 = vunpack.c.l.b16 %v309
      %v447 = vunpack.c.l.b16 %v310
      %v448 = vunpack.c.l.b16 %v311
      %v449 = vunpack.c.l.b16 %v312
      %v450 = vunpack.c.l.b16 %v313
      %v451 = vunpack.c.l.b16 %v314
      %v452 = vunpack.c.l.b16 %v315
      %v453 = vunpack.c.l.b16 %v316
      %v454 = vunpack.c.l.b16 %v317
      %v455 = vunpack.c.l.b16 %v318
      %v456 = vunpack.c.l.b16 %v319
      %v457 = vunpack.c.l.b16 %v320
      %v458 = vunpack.c.l.b16 %v321
      %v459 = vunpack.c.l.b16 %v322
      %v460 = vunpack.c.l.b16 %v323
      %v461 = vunpack.c.l.b16 %v324
      %v462 = vunpack.c.l.b16 %v325
      %v463 = vunpack.c.l.b16 %v326
      %v464 = vunpack.c.l.b16 %v327
      %v465 = vunpack.c.l.b16 %v328
      %v466 = vunpack.c.l.b16 %v329
      %v467 = vunpack.c.l.b16 %v330
      %v468 = vunpack.c.l.b16 %v331
      %v469 = vunpack.c.l.b16 %v332
      %v470 = vunpack.c.l.b16 %v333
      %v471 = vunpack.c.l.b16 %v334
      %v472 = vunpack.c.l.b16 %v335
      %v473 = vunpack.c.l.b16 %v336
      %v474 = vunpack.c.l.b16 %v337
      %v475 = vunpack.c.l.b16 %v338
      %v476 = vunpack.c.l.b16 %v339
      %v477 = vunpack.c.l.b16 %v340
      %v478 = vunpack.c.l.b16 %v341
      %v479 = vunpack.c.l.b16 %v342
      %v480 = vunpack.c.l.b16 %v343
      %v481 = vunpack.c.l.b16 %v344
      %v482 = vunpack.c.l.b16 %v345
      %v483 = vunpack.c.l.b16 %v346
      %v484 = vpack.c.b16 %v421, %v420
      %v485 = vpack.c.b16 %v423, %v422
      %v486 = vpack.c.b16 %v425, %v424
      %v487 = vpack.c.b16 %v427, %v426
      %v488 = vpack.c.b16 %v429, %v428
      %v489 = vpack.c.b16 %v431, %v430
      %v490 = vpack.c.b16 %v433, %v432
      %v491 = vpack.c.b16 %v435, %v434
      %v492 = vpack.c.b16 %v437, %v436
      %v493 = vpack.c.b16 %v439, %v438
      %v494 = vpack.c.b16 %v441, %v440
      %v495 = vpack.c.b16 %v443, %v442
      %v496 = vpack.c.b16 %v445, %v444
      %v497 = vpack.c.b16 %v447, %v446
      %v498 = vpack.c.b16 %v449, %v448
      %v499 = vpack.c.b16 %v451, %v450
      %v500 = vpack.c.b16 %v453, %v452
      %v501 = vpack.c.b16 %v455, %v454
      %v502 = vpack.c.b16 %v457, %v456
      %v503 = vpack.c.b16 %v459, %v458
      %v504 = vpack.c.b16 %v461, %v460
      %v505 = vpack.c.b16 %v463, %v462
      %v506 = vpack.c.b16 %v465, %v464
      %v507 = vpack.c.b16 %v467, %v466
      %v508 = vpack.c.b16 %v469, %v468
      %v509 = vpack.c.b16 %v471, %v470
      %v510 = vpack.c.b16 %v473, %v472
      %v511 = vpack.c.b16 %v475, %v474
      %v512 = vpack.c.b16 %v477, %v476
      %v513 = vpack.c.b16 %v479, %v478
      %v514 = vpack.c.b16 %v481, %v480
      %v515 = vpack.c.b16 %v483, %v482
      %v518 = vunpack.c.l.b16 %v347
      %v519 = vunpack.c.l.b16 %v348
      %v520 = vpack.c.b16 %v519, %v518
      %vm522 = vcmask 130048
      %v524 = vsel %vm522, %v484, 0
      %v527 = vsel %vm522, %v485, 0
      %v530 = vsel %vm522, %v486, 0
      %v533 = vsel %vm522, %v487, 0
      %v536 = vsel %vm522, %v488, 0
      %v539 = vsel %vm522, %v489, 0
      %v542 = vsel %vm522, %v490, 0
      %v545 = vsel %vm522, %v491, 0
      %v548 = vsel %vm522, %v492, 0
      %v551 = vsel %vm522, %v493, 0
      %v554 = vsel %vm522, %v494, 0
      %v557 = vsel %vm522, %v495, 0
      %v560 = vsel %vm522, %v496, 0
      %v563 = vsel %vm522, %v497, 0
      %v566 = vsel %vm522, %v498, 0
      %v569 = vsel %vm522, %v499, 0
      %v572 = vsel %vm522, %v500, 0
      %v575 = vsel %vm522, %v501, 0
      %v578 = vsel %vm522, %v502, 0
      %v581 = vsel %vm522, %v503, 0
      %v584 = vsel %vm522, %v504, 0
      %v587 = vsel %vm522, %v505, 0
      %v590 = vsel %vm522, %v506, 0
      %v593 = vsel %vm522, %v507, 0
      %v596 = vsel %vm522, %v508, 0
      %v599 = vsel %vm522, %v509, 0
      %v602 = vsel %vm522, %v510, 0
      %v605 = vsel %vm522, %v511, 0
      %v608 = vsel %vm522, %v512, 0
      %v611 = vsel %vm522, %v513, 0
      %v614 = vsel %vm522, %v514, 0
      %v617 = vsel %vm522, %v515, 0
      %619 = vmatprep.subr.bf16.mxu0 0
      %620 = vmatpush1.bf16.msra.mxu0 %v520
      %621 = vmatprep.subr.bf16.mxu0 0
      %622 = vmatpush1.bf16.msra.mxu0 0
      %623 = vmatprep.subr.bf16.mxu0 0
      %624 = vmatpush1.bf16.msra.mxu0 0
      %625 = vmatprep.subr.bf16.mxu0 0
      %626 = vmatpush1.bf16.msra.mxu0 0
      %627 = vmatprep.subr.bf16.mxu0 0
      %628 = vmatpush1.bf16.msra.mxu0 0
      %629 = vmatprep.subr.bf16.mxu0 0
      %630 = vmatpush1.bf16.msra.mxu0 0
      %631 = vmatprep.subr.bf16.mxu0 0
      %632 = vmatpush1.bf16.msra.mxu0 0
      %633 = vmatprep.subr.bf16.mxu0 0
      %634 = vmatpush1.bf16.msra.mxu0 0
      %635 = vmatprep.subr.bf16.mxu0 0
      %636 = vmatpush1.bf16.msra.mxu0 0
      %637 = vmatprep.subr.bf16.mxu0 0
      %638 = vmatpush1.bf16.msra.mxu0 0
      %639 = vmatprep.subr.bf16.mxu0 0
      %640 = vmatpush1.bf16.msra.mxu0 0
      %641 = vmatprep.subr.bf16.mxu0 0
      %642 = vmatpush1.bf16.msra.mxu0 0
      %643 = vmatprep.subr.bf16.mxu0 0
      %644 = vmatpush1.bf16.msra.mxu0 0
      %645 = vmatprep.subr.bf16.mxu0 0
      %646 = vmatpush1.bf16.msra.mxu0 0
      %647 = vmatprep.subr.bf16.mxu0 0
      %648 = vmatpush1.bf16.msra.mxu0 0
      %649 = vmatprep.subr.bf16.mxu0 0
      %650 = vmatpush1.bf16.msra.mxu0 0
      %651 = vmatprep.mubr.bf16.mxu0 0
      %652 = vmatmul.mubr.bf16.gmra.mrb[0].mxu0 %v524
      %v653 = vpop.f32.mrb[0].mxu0
      %v654 = vadd.f32 %v354, %v653
      %v655 = vpop.f32.mrb[0].mxu0
      %v656 = vpop.f32.mrb[0].mxu0
      %v657 = vadd.f32 %v354, %v656
      %v658 = vpop.f32.mrb[0].mxu0
      %659 = vmatprep.mubr.bf16.mxu0 0
      %660 = vmatmul.mubr.bf16.gmra.mrb[0].mxu0 %v527
      %v661 = vpop.f32.mrb[0].mxu0
      %v662 = vadd.f32 %v354, %v661
      %v663 = vpop.f32.mrb[0].mxu0
      %v664 = vpop.f32.mrb[0].mxu0
      %v665 = vadd.f32 %v354, %v664
      %v666 = vpop.f32.mrb[0].mxu0
      %667 = vmatprep.mubr.bf16.mxu0 0
      %668 = vmatmul.mubr.bf16.gmra.mrb[0].mxu0 %v530
      %v669 = vpop.f32.mrb[0].mxu0
      %v670 = vadd.f32 %v354, %v669
      %v671 = vpop.f32.mrb[0].mxu0
      %v672 = vpop.f32.mrb[0].mxu0
      %v673 = vadd.f32 %v354, %v672
      %v674 = vpop.f32.mrb[0].mxu0
      %675 = vmatprep.mubr.bf16.mxu0 0
      %676 = vmatmul.mubr.bf16.gmra.mrb[0].mxu0 %v533
      %v677 = vpop.f32.mrb[0].mxu0
      %v678 = vadd.f32 %v354, %v677
      %v679 = vpop.f32.mrb[0].mxu0
      %v680 = vpop.f32.mrb[0].mxu0
      %v681 = vadd.f32 %v354, %v680
      %v682 = vpop.f32.mrb[0].mxu0
      %683 = vmatprep.mubr.bf16.mxu0 0
      %684 = vmatmul.mubr.bf16.gmra.mrb[0].mxu0 %v536
      %v685 = vpop.f32.mrb[0].mxu0
      %v686 = vadd.f32 %v354, %v685
      %v687 = vpop.f32.mrb[0].mxu0
      %v688 = vpop.f32.mrb[0].mxu0
      %v689 = vadd.f32 %v354, %v688
      %v690 = vpop.f32.mrb[0].mxu0
      %691 = vmatprep.mubr.bf16.mxu0 0
      %692 = vmatmul.mubr.bf16.gmra.mrb[0].mxu0 %v539
      %v693 = vpop.f32.mrb[0].mxu0
      %v694 = vadd.f32 %v354, %v693
      %v695 = vpop.f32.mrb[0].mxu0
      %v696 = vpop.f32.mrb[0].mxu0
      %v697 = vadd.f32 %v354, %v696
      %v698 = vpop.f32.mrb[0].mxu0
      %699 = vmatprep.mubr.bf16.mxu0 0
      %700 = vmatmul.mubr.bf16.gmra.mrb[0].mxu0 %v542
      %v701 = vpop.f32.mrb[0].mxu0
      %v702 = vadd.f32 %v354, %v701
      %v703 = vpop.f32.mrb[0].mxu0
      %v704 = vpop.f32.mrb[0].mxu0
      %v705 = vadd.f32 %v354, %v704
      %v706 = vpop.f32.mrb[0].mxu0
      %707 = vmatprep.mubr.bf16.mxu0 0
      %708 = vmatmul.mubr.bf16.gmra.mrb[0].mxu0 %v545
      %v709 = vpop.f32.mrb[0].mxu0
      %v710 = vadd.f32 %v354, %v709
      %v711 = vpop.f32.mrb[0].mxu0
      %v712 = vpop.f32.mrb[0].mxu0
      %v713 = vadd.f32 %v354, %v712
      %v714 = vpop.f32.mrb[0].mxu0
      %715 = vmatprep.mubr.bf16.mxu0 0
      %716 = vmatmul.mubr.bf16.gmra.mrb[0].mxu0 %v548
      %v717 = vpop.f32.mrb[0].mxu0
      %v718 = vadd.f32 %v354, %v717
      %v719 = vpop.f32.mrb[0].mxu0
      %v720 = vpop.f32.mrb[0].mxu0
      %v721 = vadd.f32 %v354, %v720
      %v722 = vpop.f32.mrb[0].mxu0
      %723 = vmatprep.mubr.bf16.mxu0 0
      %724 = vmatmul.mubr.bf16.gmra.mrb[0].mxu0 %v551
      %v725 = vpop.f32.mrb[0].mxu0
      %v726 = vadd.f32 %v354, %v725
      %v727 = vpop.f32.mrb[0].mxu0
      %v728 = vpop.f32.mrb[0].mxu0
      %v729 = vadd.f32 %v354, %v728
      %v730 = vpop.f32.mrb[0].mxu0
      %731 = vmatprep.mubr.bf16.mxu0 0
      %732 = vmatmul.mubr.bf16.gmra.mrb[0].mxu0 %v554
      %v733 = vpop.f32.mrb[0].mxu0
      %v734 = vadd.f32 %v354, %v733
      %v735 = vpop.f32.mrb[0].mxu0
      %v736 = vpop.f32.mrb[0].mxu0
      %v737 = vadd.f32 %v354, %v736
      %v738 = vpop.f32.mrb[0].mxu0
      %739 = vmatprep.mubr.bf16.mxu0 0
      %740 = vmatmul.mubr.bf16.gmra.mrb[0].mxu0 %v557
      %v741 = vpop.f32.mrb[0].mxu0
      %v742 = vadd.f32 %v354, %v741
      %v743 = vpop.f32.mrb[0].mxu0
      %v744 = vpop.f32.mrb[0].mxu0
      %v745 = vadd.f32 %v354, %v744
      %v746 = vpop.f32.mrb[0].mxu0
      %747 = vmatprep.mubr.bf16.mxu0 0
      %748 = vmatmul.mubr.bf16.gmra.mrb[0].mxu0 %v560
      %v749 = vpop.f32.mrb[0].mxu0
      %v750 = vadd.f32 %v354, %v749
      %v751 = vpop.f32.mrb[0].mxu0
      %v752 = vpop.f32.mrb[0].mxu0
      %v753 = vadd.f32 %v354, %v752
      %v754 = vpop.f32.mrb[0].mxu0
      %755 = vmatprep.mubr.bf16.mxu0 0
      %756 = vmatmul.mubr.bf16.gmra.mrb[0].mxu0 %v563
      %v757 = vpop.f32.mrb[0].mxu0
      %v758 = vadd.f32 %v354, %v757
      %v759 = vpop.f32.mrb[0].mxu0
      %v760 = vpop.f32.mrb[0].mxu0
      %v761 = vadd.f32 %v354, %v760
      %v762 = vpop.f32.mrb[0].mxu0
      %763 = vmatprep.mubr.bf16.mxu0 0
      %764 = vmatmul.mubr.bf16.gmra.mrb[0].mxu0 %v566
      %v765 = vpop.f32.mrb[0].mxu0
      %v766 = vadd.f32 %v354, %v765
      %v767 = vpop.f32.mrb[0].mxu0
      %v768 = vpop.f32.mrb[0].mxu0
      %v769 = vadd.f32 %v354, %v768
      %v770 = vpop.f32.mrb[0].mxu0
      %771 = vmatprep.mubr.bf16.mxu0 0
      %772 = vmatmul.mubr.bf16.gmra.mrb[0].mxu0 %v569
      %v773 = vpop.f32.mrb[0].mxu0
      %v774 = vadd.f32 %v354, %v773
      %v775 = vpop.f32.mrb[0].mxu0
      %v776 = vpop.f32.mrb[0].mxu0
      %v777 = vadd.f32 %v354, %v776
      %v778 = vpop.f32.mrb[0].mxu0
      %779 = vmatprep.mubr.bf16.mxu0 0
      %780 = vmatmul.mubr.bf16.gmra.mrb[0].mxu0 %v572
      %v781 = vpop.f32.mrb[0].mxu0
      %v782 = vadd.f32 %v354, %v781
      %v783 = vpop.f32.mrb[0].mxu0
      %v784 = vpop.f32.mrb[0].mxu0
      %v785 = vadd.f32 %v354, %v784
      %v786 = vpop.f32.mrb[0].mxu0
      %787 = vmatprep.mubr.bf16.mxu0 0
      %788 = vmatmul.mubr.bf16.gmra.mrb[0].mxu0 %v575
      %v789 = vpop.f32.mrb[0].mxu0
      %v790 = vadd.f32 %v354, %v789
      %v791 = vpop.f32.mrb[0].mxu0
      %v792 = vpop.f32.mrb[0].mxu0
      %v793 = vadd.f32 %v354, %v792
      %v794 = vpop.f32.mrb[0].mxu0
      %795 = vmatprep.mubr.bf16.mxu0 0
      %796 = vmatmul.mubr.bf16.gmra.mrb[0].mxu0 %v578
      %v797 = vpop.f32.mrb[0].mxu0
      %v798 = vadd.f32 %v354, %v797
      %v799 = vpop.f32.mrb[0].mxu0
      %v800 = vpop.f32.mrb[0].mxu0
      %v801 = vadd.f32 %v354, %v800
      %v802 = vpop.f32.mrb[0].mxu0
      %803 = vmatprep.mubr.bf16.mxu0 0
      %804 = vmatmul.mubr.bf16.gmra.mrb[0].mxu0 %v581
      %v805 = vpop.f32.mrb[0].mxu0
      %v806 = vadd.f32 %v354, %v805
      %v807 = vpop.f32.mrb[0].mxu0
      %v808 = vpop.f32.mrb[0].mxu0
      %v809 = vadd.f32 %v354, %v808
      %v810 = vpop.f32.mrb[0].mxu0
      %811 = vmatprep.mubr.bf16.mxu0 0
      %812 = vmatmul.mubr.bf16.gmra.mrb[0].mxu0 %v584
      %v813 = vpop.f32.mrb[0].mxu0
      %v814 = vadd.f32 %v354, %v813
      %v815 = vpop.f32.mrb[0].mxu0
      %v816 = vpop.f32.mrb[0].mxu0
      %v817 = vadd.f32 %v354, %v816
      %v818 = vpop.f32.mrb[0].mxu0
      %819 = vmatprep.mubr.bf16.mxu0 0
      %820 = vmatmul.mubr.bf16.gmra.mrb[0].mxu0 %v587
      %v821 = vpop.f32.mrb[0].mxu0
      %v822 = vadd.f32 %v354, %v821
      %v823 = vpop.f32.mrb[0].mxu0
      %v824 = vpop.f32.mrb[0].mxu0
      %v825 = vadd.f32 %v354, %v824
      %v826 = vpop.f32.mrb[0].mxu0
      %827 = vmatprep.mubr.bf16.mxu0 0
      %828 = vmatmul.mubr.bf16.gmra.mrb[0].mxu0 %v590
      %v829 = vpop.f32.mrb[0].mxu0
      %v830 = vadd.f32 %v354, %v829
      %v831 = vpop.f32.mrb[0].mxu0
      %v832 = vpop.f32.mrb[0].mxu0
      %v833 = vadd.f32 %v354, %v832
      %v834 = vpop.f32.mrb[0].mxu0
      %835 = vmatprep.mubr.bf16.mxu0 0
      %836 = vmatmul.mubr.bf16.gmra.mrb[0].mxu0 %v593
      %v837 = vpop.f32.mrb[0].mxu0
      %v838 = vadd.f32 %v354, %v837
      %v839 = vpop.f32.mrb[0].mxu0
      %v840 = vpop.f32.mrb[0].mxu0
      %v841 = vadd.f32 %v354, %v840
      %v842 = vpop.f32.mrb[0].mxu0
      %843 = vmatprep.mubr.bf16.mxu0 0
      %844 = vmatmul.mubr.bf16.gmra.mrb[0].mxu0 %v596
      %v845 = vpop.f32.mrb[0].mxu0
      %v846 = vadd.f32 %v354, %v845
      %v847 = vpop.f32.mrb[0].mxu0
      %v848 = vpop.f32.mrb[0].mxu0
      %v849 = vadd.f32 %v354, %v848
      %v850 = vpop.f32.mrb[0].mxu0
      %851 = vmatprep.mubr.bf16.mxu0 0
      %852 = vmatmul.mubr.bf16.gmra.mrb[0].mxu0 %v599
      %v853 = vpop.f32.mrb[0].mxu0
      %v854 = vadd.f32 %v354, %v853
      %v855 = vpop.f32.mrb[0].mxu0
      %v856 = vpop.f32.mrb[0].mxu0
      %v857 = vadd.f32 %v354, %v856
      %v858 = vpop.f32.mrb[0].mxu0
      %859 = vmatprep.mubr.bf16.mxu0 0
      %860 = vmatmul.mubr.bf16.gmra.mrb[0].mxu0 %v602
      %v861 = vpop.f32.mrb[0].mxu0
      %v862 = vadd.f32 %v354, %v861
      %v863 = vpop.f32.mrb[0].mxu0
      %v864 = vpop.f32.mrb[0].mxu0
      %v865 = vadd.f32 %v354, %v864
      %v866 = vpop.f32.mrb[0].mxu0
      %867 = vmatprep.mubr.bf16.mxu0 0
      %868 = vmatmul.mubr.bf16.gmra.mrb[0].mxu0 %v605
      %v869 = vpop.f32.mrb[0].mxu0
      %v870 = vadd.f32 %v354, %v869
      %v871 = vpop.f32.mrb[0].mxu0
      %v872 = vpop.f32.mrb[0].mxu0
      %v873 = vadd.f32 %v354, %v872
      %v874 = vpop.f32.mrb[0].mxu0
      %875 = vmatprep.mubr.bf16.mxu0 0
      %876 = vmatmul.mubr.bf16.gmra.mrb[0].mxu0 %v608
      %v877 = vpop.f32.mrb[0].mxu0
      %v878 = vadd.f32 %v354, %v877
      %v879 = vpop.f32.mrb[0].mxu0
      %v880 = vpop.f32.mrb[0].mxu0
      %v881 = vadd.f32 %v354, %v880
      %v882 = vpop.f32.mrb[0].mxu0
      %883 = vmatprep.mubr.bf16.mxu0 0
      %884 = vmatmul.mubr.bf16.gmra.mrb[0].mxu0 %v611
      %v885 = vpop.f32.mrb[0].mxu0
      %v886 = vadd.f32 %v354, %v885
      %v887 = vpop.f32.mrb[0].mxu0
      %v888 = vpop.f32.mrb[0].mxu0
      %v889 = vadd.f32 %v354, %v888
      %v890 = vpop.f32.mrb[0].mxu0
      %891 = vmatprep.mubr.bf16.mxu0 0
      %892 = vmatmul.mubr.bf16.gmra.mrb[0].mxu0 %v614
      %v893 = vpop.f32.mrb[0].mxu0
      %v894 = vadd.f32 %v354, %v893
      %v895 = vpop.f32.mrb[0].mxu0
      %v896 = vpop.f32.mrb[0].mxu0
      %v897 = vadd.f32 %v354, %v896
      %v898 = vpop.f32.mrb[0].mxu0
      %899 = vmatprep.mubr.bf16.mxu0 0
      %900 = vmatmul.mubr.bf16.gmra.mrb[0].mxu0 %v617
      %v901 = vpop.f32.mrb[0].mxu0
      %v902 = vadd.f32 %v354, %v901
      %v903 = vpop.f32.mrb[0].mxu0
      %v904 = vpop.f32.mrb[0].mxu0
      %v905 = vadd.f32 %v354, %v904
      %v906 = vpop.f32.mrb[0].mxu0
      %907 = vdwg.mxu0
      %v908 = vtanh.pop %v654
      %v909 = vtanh.pop %v657
      %v910 = vtanh.pop %v662
      %v911 = vtanh.pop %v665
      %v912 = vtanh.pop %v670
      %v913 = vtanh.pop %v673
      %v914 = vtanh.pop %v678
      %v915 = vtanh.pop %v681
      %v916 = vtanh.pop %v686
      %v917 = vtanh.pop %v689
      %v918 = vtanh.pop %v694
      %v919 = vtanh.pop %v697
      %v920 = vtanh.pop %v702
      %v921 = vtanh.pop %v705
      %v922 = vtanh.pop %v710
      %v923 = vtanh.pop %v713
      %v924 = vtanh.pop %v718
      %v925 = vtanh.pop %v721
      %v926 = vtanh.pop %v726
      %v927 = vtanh.pop %v729
      %v928 = vtanh.pop %v734
      %v929 = vtanh.pop %v737
      %v930 = vtanh.pop %v742
      %v931 = vtanh.pop %v745
      %v932 = vtanh.pop %v750
      %v933 = vtanh.pop %v753
      %v934 = vtanh.pop %v758
      %v935 = vtanh.pop %v761
      %v936 = vtanh.pop %v766
      %v937 = vtanh.pop %v769
      %v938 = vtanh.pop %v774
      %v939 = vtanh.pop %v777
      %v940 = vtanh.pop %v782
      %v941 = vtanh.pop %v785
      %v942 = vtanh.pop %v790
      %v943 = vtanh.pop %v793
      %v944 = vtanh.pop %v798
      %v945 = vtanh.pop %v801
      %v946 = vtanh.pop %v806
      %v947 = vtanh.pop %v809
      %v948 = vtanh.pop %v814
      %v949 = vtanh.pop %v817
      %v950 = vtanh.pop %v822
      %v951 = vtanh.pop %v825
      %v952 = vtanh.pop %v830
      %v953 = vtanh.pop %v833
      %v954 = vtanh.pop %v838
      %v955 = vtanh.pop %v841
      %v956 = vtanh.pop %v846
      %v957 = vtanh.pop %v849
      %v958 = vtanh.pop %v854
      %v959 = vtanh.pop %v857
      %v960 = vtanh.pop %v862
      %v961 = vtanh.pop %v865
      %v962 = vtanh.pop %v870
      %v963 = vtanh.pop %v873
      %v964 = vtanh.pop %v878
      %v965 = vtanh.pop %v881
      %v966 = vtanh.pop %v886
      %v967 = vtanh.pop %v889
      %v968 = vtanh.pop %v894
      %v969 = vtanh.pop %v897
      %v970 = vtanh.pop %v902
      %v971 = vtanh.pop %v905
      %v972 = vpack.c.bf16 %v909, %v908
      %v973 = vpack.c.bf16 %v911, %v910
      %v974 = vpack.c.bf16 %v913, %v912
      %v975 = vpack.c.bf16 %v915, %v914
      %v976 = vpack.c.bf16 %v917, %v916
      %v977 = vpack.c.bf16 %v919, %v918
      %v978 = vpack.c.bf16 %v921, %v920
      %v979 = vpack.c.bf16 %v923, %v922
      %v980 = vpack.c.bf16 %v925, %v924
      %v981 = vpack.c.bf16 %v927, %v926
      %v982 = vpack.c.bf16 %v929, %v928
      %v983 = vpack.c.bf16 %v931, %v930
      %v984 = vpack.c.bf16 %v933, %v932
      %v985 = vpack.c.bf16 %v935, %v934
      %v986 = vpack.c.bf16 %v937, %v936
      %v987 = vpack.c.bf16 %v939, %v938
      %v988 = vpack.c.bf16 %v941, %v940
      %v989 = vpack.c.bf16 %v943, %v942
      %v990 = vpack.c.bf16 %v945, %v944
      %v991 = vpack.c.bf16 %v947, %v946
      %v992 = vpack.c.bf16 %v949, %v948
      %v993 = vpack.c.bf16 %v951, %v950
      %v994 = vpack.c.bf16 %v953, %v952
      %v995 = vpack.c.bf16 %v955, %v954
      %v996 = vpack.c.bf16 %v957, %v956
      %v997 = vpack.c.bf16 %v959, %v958
      %v998 = vpack.c.bf16 %v961, %v960
      %v999 = vpack.c.bf16 %v963, %v962
      %v1000 = vpack.c.bf16 %v965, %v964
      %v1001 = vpack.c.bf16 %v967, %v966
      %v1002 = vpack.c.bf16 %v969, %v968
      %v1003 = vpack.c.bf16 %v971, %v970
      %v1004 = vld [vmem:[%s3] sm:$0xf]
      %v1005 = vld [vmem:[%s3 + $0x4] sm:$0xf]
      %v1006 = vld [vmem:[%s3 + $0x8] sm:$0xf]
      %v1007 = vld [vmem:[%s3 + $0xc] sm:$0xf]
      %v1008 = vld [vmem:[%s3 + $0x10] sm:$0xf]
      %v1009 = vld [vmem:[%s3 + $0x14] sm:$0xf]
      %v1010 = vld [vmem:[%s3 + $0x18] sm:$0xf]
      %v1011 = vld [vmem:[%s3 + $0x1c] sm:$0xf]
      %v1012 = vld [vmem:[%s4] sm:$0x1]
      %v1014 = vlaneseq
      %v1015 = vshrl.u32 %v1014, 7
      %v1016 = vsub.s32 0, %v1015
      %v1017 = vrot.slane %v1012, %v1016
      %v1027 = vunpack.c.l.b16 %v1004
      %v1028 = vunpack.c.l.b16 %v1005
      %v1029 = vunpack.c.l.b16 %v1006
      %v1030 = vunpack.c.l.b16 %v1007
      %v1031 = vunpack.c.l.b16 %v1008
      %v1032 = vunpack.c.l.b16 %v1009
      %v1033 = vunpack.c.l.b16 %v1010
      %v1034 = vunpack.c.l.b16 %v1011
      %v1035 = vpack.c.b16 %v1028, %v1027
      %v1036 = vpack.c.b16 %v1030, %v1029
      %v1037 = vpack.c.b16 %v1032, %v1031
      %v1038 = vpack.c.b16 %v1034, %v1033
      %vm1043 = vcmask 523264
      %v1045 = vsel %vm1043, %v972, 0
      %v1048 = vsel %vm1043, %v973, 0
      %v1051 = vsel %vm1043, %v974, 0
      %v1054 = vsel %vm1043, %v975, 0
      %v1057 = vsel %vm1043, %v976, 0
      %v1060 = vsel %vm1043, %v977, 0
      %v1063 = vsel %vm1043, %v978, 0
      %v1066 = vsel %vm1043, %v979, 0
      %v1069 = vsel %vm1043, %v980, 0
      %v1072 = vsel %vm1043, %v981, 0
      %v1075 = vsel %vm1043, %v982, 0
      %v1078 = vsel %vm1043, %v983, 0
      %v1081 = vsel %vm1043, %v984, 0
      %v1084 = vsel %vm1043, %v985, 0
      %v1087 = vsel %vm1043, %v986, 0
      %v1090 = vsel %vm1043, %v987, 0
      %v1093 = vsel %vm1043, %v988, 0
      %v1096 = vsel %vm1043, %v989, 0
      %v1099 = vsel %vm1043, %v990, 0
      %v1102 = vsel %vm1043, %v991, 0
      %v1105 = vsel %vm1043, %v992, 0
      %v1108 = vsel %vm1043, %v993, 0
      %v1111 = vsel %vm1043, %v994, 0
      %v1114 = vsel %vm1043, %v995, 0
      %v1117 = vsel %vm1043, %v996, 0
      %v1120 = vsel %vm1043, %v997, 0
      %v1123 = vsel %vm1043, %v998, 0
      %v1126 = vsel %vm1043, %v999, 0
      %v1129 = vsel %vm1043, %v1000, 0
      %v1132 = vsel %vm1043, %v1001, 0
      %v1135 = vsel %vm1043, %v1002, 0
      %v1138 = vsel %vm1043, %v1003, 0
      %1140 = vmatprep.subr.bf16.mxu0 0
      %1141 = vmatpush1.bf16.msra.mxu0 %v1035
      %1142 = vmatprep.subr.bf16.mxu0 0
      %1143 = vmatpush1.bf16.msra.mxu0 %v1036
      %1144 = vmatprep.subr.bf16.mxu0 0
      %1145 = vmatpush1.bf16.msra.mxu0 %v1037
      %1146 = vmatprep.subr.bf16.mxu0 0
      %1147 = vmatpush1.bf16.msra.mxu0 %v1038
      %1148 = vmatprep.subr.bf16.mxu0 0
      %1149 = vmatpush1.bf16.msra.mxu0 0
      %1150 = vmatprep.subr.bf16.mxu0 0
      %1151 = vmatpush1.bf16.msra.mxu0 0
      %1152 = vmatprep.subr.bf16.mxu0 0
      %1153 = vmatpush1.bf16.msra.mxu0 0
      %1154 = vmatprep.subr.bf16.mxu0 0
      %1155 = vmatpush1.bf16.msra.mxu0 0
      %1156 = vmatprep.subr.bf16.mxu0 0
      %1157 = vmatpush1.bf16.msra.mxu0 0
      %1158 = vmatprep.subr.bf16.mxu0 0
      %1159 = vmatpush1.bf16.msra.mxu0 0
      %1160 = vmatprep.subr.bf16.mxu0 0
      %1161 = vmatpush1.bf16.msra.mxu0 0
      %1162 = vmatprep.subr.bf16.mxu0 0
      %1163 = vmatpush1.bf16.msra.mxu0 0
      %1164 = vmatprep.subr.bf16.mxu0 0
      %1165 = vmatpush1.bf16.msra.mxu0 0
      %1166 = vmatprep.subr.bf16.mxu0 0
      %1167 = vmatpush1.bf16.msra.mxu0 0
      %1168 = vmatprep.subr.bf16.mxu0 0
      %1169 = vmatpush1.bf16.msra.mxu0 0
      %1170 = vmatprep.subr.bf16.mxu0 0
      %1171 = vmatpush1.bf16.msra.mxu0 0
      %1172 = vmatprep.mubr.bf16.mxu0 0
      %1173 = vmatmul.mubr.bf16.gmra.mrb[0].mxu0 %v1045
      %v1174 = vpop.f32.mrb[0].mxu0
      %v1175 = vadd.f32 %v1017, %v1174
      %v1176 = vpop.f32.mrb[0].mxu0
      %v1177 = vpop.f32.mrb[0].mxu0
      %v1178 = vadd.f32 %v1017, %v1177
      %v1179 = vpop.f32.mrb[0].mxu0
      %1180 = vmatprep.mubr.bf16.mxu0 0
      %1181 = vmatmul.mubr.bf16.gmra.mrb[0].mxu0 %v1048
      %v1182 = vpop.f32.mrb[0].mxu0
      %v1183 = vadd.f32 %v1017, %v1182
      %v1184 = vpop.f32.mrb[0].mxu0
      %v1185 = vpop.f32.mrb[0].mxu0
      %v1186 = vadd.f32 %v1017, %v1185
      %v1187 = vpop.f32.mrb[0].mxu0
      %1188 = vmatprep.mubr.bf16.mxu0 0
      %1189 = vmatmul.mubr.bf16.gmra.mrb[0].mxu0 %v1051
      %v1190 = vpop.f32.mrb[0].mxu0
      %v1191 = vadd.f32 %v1017, %v1190
      %v1192 = vpop.f32.mrb[0].mxu0
      %v1193 = vpop.f32.mrb[0].mxu0
      %v1194 = vadd.f32 %v1017, %v1193
      %v1195 = vpop.f32.mrb[0].mxu0
      %1196 = vmatprep.mubr.bf16.mxu0 0
      %1197 = vmatmul.mubr.bf16.gmra.mrb[0].mxu0 %v1054
      %v1198 = vpop.f32.mrb[0].mxu0
      %v1199 = vadd.f32 %v1017, %v1198
      %v1200 = vpop.f32.mrb[0].mxu0
      %v1201 = vpop.f32.mrb[0].mxu0
      %v1202 = vadd.f32 %v1017, %v1201
      %v1203 = vpop.f32.mrb[0].mxu0
      %1204 = vmatprep.mubr.bf16.mxu0 0
      %1205 = vmatmul.mubr.bf16.gmra.mrb[0].mxu0 %v1057
      %v1206 = vpop.f32.mrb[0].mxu0
      %v1207 = vadd.f32 %v1017, %v1206
      %v1208 = vpop.f32.mrb[0].mxu0
      %v1209 = vpop.f32.mrb[0].mxu0
      %v1210 = vadd.f32 %v1017, %v1209
      %v1211 = vpop.f32.mrb[0].mxu0
      %1212 = vmatprep.mubr.bf16.mxu0 0
      %1213 = vmatmul.mubr.bf16.gmra.mrb[0].mxu0 %v1060
      %v1214 = vpop.f32.mrb[0].mxu0
      %v1215 = vadd.f32 %v1017, %v1214
      %v1216 = vpop.f32.mrb[0].mxu0
      %v1217 = vpop.f32.mrb[0].mxu0
      %v1218 = vadd.f32 %v1017, %v1217
      %v1219 = vpop.f32.mrb[0].mxu0
      %1220 = vmatprep.mubr.bf16.mxu0 0
      %1221 = vmatmul.mubr.bf16.gmra.mrb[0].mxu0 %v1063
      %v1222 = vpop.f32.mrb[0].mxu0
      %v1223 = vadd.f32 %v1017, %v1222
      %v1224 = vpop.f32.mrb[0].mxu0
      %v1225 = vpop.f32.mrb[0].mxu0
      %v1226 = vadd.f32 %v1017, %v1225
      %v1227 = vpop.f32.mrb[0].mxu0
      %1228 = vmatprep.mubr.bf16.mxu0 0
      %1229 = vmatmul.mubr.bf16.gmra.mrb[0].mxu0 %v1066
      %v1230 = vpop.f32.mrb[0].mxu0
      %v1231 = vadd.f32 %v1017, %v1230
      %v1232 = vpop.f32.mrb[0].mxu0
      %v1233 = vpop.f32.mrb[0].mxu0
      %v1234 = vadd.f32 %v1017, %v1233
      %v1235 = vpop.f32.mrb[0].mxu0
      %1236 = vmatprep.mubr.bf16.mxu0 0
      %1237 = vmatmul.mubr.bf16.gmra.mrb[0].mxu0 %v1069
      %v1238 = vpop.f32.mrb[0].mxu0
      %v1239 = vadd.f32 %v1017, %v1238
      %v1240 = vpop.f32.mrb[0].mxu0
      %v1241 = vpop.f32.mrb[0].mxu0
      %v1242 = vadd.f32 %v1017, %v1241
      %v1243 = vpop.f32.mrb[0].mxu0
      %1244 = vmatprep.mubr.bf16.mxu0 0
      %1245 = vmatmul.mubr.bf16.gmra.mrb[0].mxu0 %v1072
      %v1246 = vpop.f32.mrb[0].mxu0
      %v1247 = vadd.f32 %v1017, %v1246
      %v1248 = vpop.f32.mrb[0].mxu0
      %v1249 = vpop.f32.mrb[0].mxu0
      %v1250 = vadd.f32 %v1017, %v1249
      %v1251 = vpop.f32.mrb[0].mxu0
      %1252 = vmatprep.mubr.bf16.mxu0 0
      %1253 = vmatmul.mubr.bf16.gmra.mrb[0].mxu0 %v1075
      %v1254 = vpop.f32.mrb[0].mxu0
      %v1255 = vadd.f32 %v1017, %v1254
      %v1256 = vpop.f32.mrb[0].mxu0
      %v1257 = vpop.f32.mrb[0].mxu0
      %v1258 = vadd.f32 %v1017, %v1257
      %v1259 = vpop.f32.mrb[0].mxu0
      %1260 = vmatprep.mubr.bf16.mxu0 0
      %1261 = vmatmul.mubr.bf16.gmra.mrb[0].mxu0 %v1078
      %v1262 = vpop.f32.mrb[0].mxu0
      %v1263 = vadd.f32 %v1017, %v1262
      %v1264 = vpop.f32.mrb[0].mxu0
      %v1265 = vpop.f32.mrb[0].mxu0
      %v1266 = vadd.f32 %v1017, %v1265
      %v1267 = vpop.f32.mrb[0].mxu0
      %1268 = vmatprep.mubr.bf16.mxu0 0
      %1269 = vmatmul.mubr.bf16.gmra.mrb[0].mxu0 %v1081
      %v1270 = vpop.f32.mrb[0].mxu0
      %v1271 = vadd.f32 %v1017, %v1270
      %v1272 = vpop.f32.mrb[0].mxu0
      %v1273 = vpop.f32.mrb[0].mxu0
      %v1274 = vadd.f32 %v1017, %v1273
      %v1275 = vpop.f32.mrb[0].mxu0
      %1276 = vmatprep.mubr.bf16.mxu0 0
      %1277 = vmatmul.mubr.bf16.gmra.mrb[0].mxu0 %v1084
      %v1278 = vpop.f32.mrb[0].mxu0
      %v1279 = vadd.f32 %v1017, %v1278
      %v1280 = vpop.f32.mrb[0].mxu0
      %v1281 = vpop.f32.mrb[0].mxu0
      %v1282 = vadd.f32 %v1017, %v1281
      %v1283 = vpop.f32.mrb[0].mxu0
      %1284 = vmatprep.mubr.bf16.mxu0 0
      %1285 = vmatmul.mubr.bf16.gmra.mrb[0].mxu0 %v1087
      %v1286 = vpop.f32.mrb[0].mxu0
      %v1287 = vadd.f32 %v1017, %v1286
      %v1288 = vpop.f32.mrb[0].mxu0
      %v1289 = vpop.f32.mrb[0].mxu0
      %v1290 = vadd.f32 %v1017, %v1289
      %v1291 = vpop.f32.mrb[0].mxu0
      %1292 = vmatprep.mubr.bf16.mxu0 0
      %1293 = vmatmul.mubr.bf16.gmra.mrb[0].mxu0 %v1090
      %v1294 = vpop.f32.mrb[0].mxu0
      %v1295 = vadd.f32 %v1017, %v1294
      %v1296 = vpop.f32.mrb[0].mxu0
      %v1297 = vpop.f32.mrb[0].mxu0
      %v1298 = vadd.f32 %v1017, %v1297
      %v1299 = vpop.f32.mrb[0].mxu0
      %1300 = vmatprep.mubr.bf16.mxu0 0
      %1301 = vmatmul.mubr.bf16.gmra.mrb[0].mxu0 %v1093
      %v1302 = vpop.f32.mrb[0].mxu0
      %v1303 = vadd.f32 %v1017, %v1302
      %v1304 = vpop.f32.mrb[0].mxu0
      %v1305 = vpop.f32.mrb[0].mxu0
      %v1306 = vadd.f32 %v1017, %v1305
      %v1307 = vpop.f32.mrb[0].mxu0
      %1308 = vmatprep.mubr.bf16.mxu0 0
      %1309 = vmatmul.mubr.bf16.gmra.mrb[0].mxu0 %v1096
      %v1310 = vpop.f32.mrb[0].mxu0
      %v1311 = vadd.f32 %v1017, %v1310
      %v1312 = vpop.f32.mrb[0].mxu0
      %v1313 = vpop.f32.mrb[0].mxu0
      %v1314 = vadd.f32 %v1017, %v1313
      %v1315 = vpop.f32.mrb[0].mxu0
      %1316 = vmatprep.mubr.bf16.mxu0 0
      %1317 = vmatmul.mubr.bf16.gmra.mrb[0].mxu0 %v1099
      %v1318 = vpop.f32.mrb[0].mxu0
      %v1319 = vadd.f32 %v1017, %v1318
      %v1320 = vpop.f32.mrb[0].mxu0
      %v1321 = vpop.f32.mrb[0].mxu0
      %v1322 = vadd.f32 %v1017, %v1321
      %v1323 = vpop.f32.mrb[0].mxu0
      %1324 = vmatprep.mubr.bf16.mxu0 0
      %1325 = vmatmul.mubr.bf16.gmra.mrb[0].mxu0 %v1102
      %v1326 = vpop.f32.mrb[0].mxu0
      %v1327 = vadd.f32 %v1017, %v1326
      %v1328 = vpop.f32.mrb[0].mxu0
      %v1329 = vpop.f32.mrb[0].mxu0
      %v1330 = vadd.f32 %v1017, %v1329
      %v1331 = vpop.f32.mrb[0].mxu0
      %1332 = vmatprep.mubr.bf16.mxu0 0
      %1333 = vmatmul.mubr.bf16.gmra.mrb[0].mxu0 %v1105
      %v1334 = vpop.f32.mrb[0].mxu0
      %v1335 = vadd.f32 %v1017, %v1334
      %v1336 = vpop.f32.mrb[0].mxu0
      %v1337 = vpop.f32.mrb[0].mxu0
      %v1338 = vadd.f32 %v1017, %v1337
      %v1339 = vpop.f32.mrb[0].mxu0
      %1340 = vmatprep.mubr.bf16.mxu0 0
      %1341 = vmatmul.mubr.bf16.gmra.mrb[0].mxu0 %v1108
      %v1342 = vpop.f32.mrb[0].mxu0
      %v1343 = vadd.f32 %v1017, %v1342
      %v1344 = vpop.f32.mrb[0].mxu0
      %v1345 = vpop.f32.mrb[0].mxu0
      %v1346 = vadd.f32 %v1017, %v1345
      %v1347 = vpop.f32.mrb[0].mxu0
      %1348 = vmatprep.mubr.bf16.mxu0 0
      %1349 = vmatmul.mubr.bf16.gmra.mrb[0].mxu0 %v1111
      %v1350 = vpop.f32.mrb[0].mxu0
      %v1351 = vadd.f32 %v1017, %v1350
      %v1352 = vpop.f32.mrb[0].mxu0
      %v1353 = vpop.f32.mrb[0].mxu0
      %v1354 = vadd.f32 %v1017, %v1353
      %v1355 = vpop.f32.mrb[0].mxu0
      %1356 = vmatprep.mubr.bf16.mxu0 0
      %1357 = vmatmul.mubr.bf16.gmra.mrb[0].mxu0 %v1114
      %v1358 = vpop.f32.mrb[0].mxu0
      %v1359 = vadd.f32 %v1017, %v1358
      %v1360 = vpop.f32.mrb[0].mxu0
      %v1361 = vpop.f32.mrb[0].mxu0
      %v1362 = vadd.f32 %v1017, %v1361
      %v1363 = vpop.f32.mrb[0].mxu0
      %1364 = vmatprep.mubr.bf16.mxu0 0
      %1365 = vmatmul.mubr.bf16.gmra.mrb[0].mxu0 %v1117
      %v1366 = vpop.f32.mrb[0].mxu0
      %v1367 = vadd.f32 %v1017, %v1366
      %v1368 = vpop.f32.mrb[0].mxu0
      %v1369 = vpop.f32.mrb[0].mxu0
      %v1370 = vadd.f32 %v1017, %v1369
      %v1371 = vpop.f32.mrb[0].mxu0
      %1372 = vmatprep.mubr.bf16.mxu0 0
      %1373 = vmatmul.mubr.bf16.gmra.mrb[0].mxu0 %v1120
      %v1374 = vpop.f32.mrb[0].mxu0
      %v1375 = vadd.f32 %v1017, %v1374
      %v1376 = vpop.f32.mrb[0].mxu0
      %v1377 = vpop.f32.mrb[0].mxu0
      %v1378 = vadd.f32 %v1017, %v1377
      %v1379 = vpop.f32.mrb[0].mxu0
      %1380 = vmatprep.mubr.bf16.mxu0 0
      %1381 = vmatmul.mubr.bf16.gmra.mrb[0].mxu0 %v1123
      %v1382 = vpop.f32.mrb[0].mxu0
      %v1383 = vadd.f32 %v1017, %v1382
      %v1384 = vpop.f32.mrb[0].mxu0
      %v1385 = vpop.f32.mrb[0].mxu0
      %v1386 = vadd.f32 %v1017, %v1385
      %v1387 = vpop.f32.mrb[0].mxu0
      %1388 = vmatprep.mubr.bf16.mxu0 0
      %1389 = vmatmul.mubr.bf16.gmra.mrb[0].mxu0 %v1126
      %v1390 = vpop.f32.mrb[0].mxu0
      %v1391 = vadd.f32 %v1017, %v1390
      %v1392 = vpop.f32.mrb[0].mxu0
      %v1393 = vpop.f32.mrb[0].mxu0
      %v1394 = vadd.f32 %v1017, %v1393
      %v1395 = vpop.f32.mrb[0].mxu0
      %1396 = vmatprep.mubr.bf16.mxu0 0
      %1397 = vmatmul.mubr.bf16.gmra.mrb[0].mxu0 %v1129
      %v1398 = vpop.f32.mrb[0].mxu0
      %v1399 = vadd.f32 %v1017, %v1398
      %v1400 = vpop.f32.mrb[0].mxu0
      %v1401 = vpop.f32.mrb[0].mxu0
      %v1402 = vadd.f32 %v1017, %v1401
      %v1403 = vpop.f32.mrb[0].mxu0
      %1404 = vmatprep.mubr.bf16.mxu0 0
      %1405 = vmatmul.mubr.bf16.gmra.mrb[0].mxu0 %v1132
      %v1406 = vpop.f32.mrb[0].mxu0
      %v1407 = vadd.f32 %v1017, %v1406
      %v1408 = vpop.f32.mrb[0].mxu0
      %v1409 = vpop.f32.mrb[0].mxu0
      %v1410 = vadd.f32 %v1017, %v1409
      %v1411 = vpop.f32.mrb[0].mxu0
      %1412 = vmatprep.mubr.bf16.mxu0 0
      %1413 = vmatmul.mubr.bf16.gmra.mrb[0].mxu0 %v1135
      %v1414 = vpop.f32.mrb[0].mxu0
      %v1415 = vadd.f32 %v1017, %v1414
      %v1416 = vpop.f32.mrb[0].mxu0
      %v1417 = vpop.f32.mrb[0].mxu0
      %v1418 = vadd.f32 %v1017, %v1417
      %v1419 = vpop.f32.mrb[0].mxu0
      %1420 = vmatprep.mubr.bf16.mxu0 0
      %1421 = vmatmul.mubr.bf16.gmra.mrb[0].mxu0 %v1138
      %v1422 = vpop.f32.mrb[0].mxu0
      %v1423 = vadd.f32 %v1017, %v1422
      %v1424 = vpop.f32.mrb[0].mxu0
      %v1425 = vpop.f32.mrb[0].mxu0
      %v1426 = vadd.f32 %v1017, %v1425
      %v1427 = vpop.f32.mrb[0].mxu0
      %1428 = vdwg.mxu0
      %v1429 = vtanh.pop %v1175
      %v1430 = vtanh.pop %v1178
      %v1431 = vtanh.pop %v1183
      %v1432 = vtanh.pop %v1186
      %v1433 = vtanh.pop %v1191
      %v1434 = vtanh.pop %v1194
      %v1435 = vtanh.pop %v1199
      %v1436 = vtanh.pop %v1202
      %v1437 = vtanh.pop %v1207
      %v1438 = vtanh.pop %v1210
      %v1439 = vtanh.pop %v1215
      %v1440 = vtanh.pop %v1218
      %v1441 = vtanh.pop %v1223
      %v1442 = vtanh.pop %v1226
      %v1443 = vtanh.pop %v1231
      %v1444 = vtanh.pop %v1234
      %v1445 = vtanh.pop %v1239
      %v1446 = vtanh.pop %v1242
      %v1447 = vtanh.pop %v1247
      %v1448 = vtanh.pop %v1250
      %v1449 = vtanh.pop %v1255
      %v1450 = vtanh.pop %v1258
      %v1451 = vtanh.pop %v1263
      %v1452 = vtanh.pop %v1266
      %v1453 = vtanh.pop %v1271
      %v1454 = vtanh.pop %v1274
      %v1455 = vtanh.pop %v1279
      %v1456 = vtanh.pop %v1282
      %v1457 = vtanh.pop %v1287
      %v1458 = vtanh.pop %v1290
      %v1459 = vtanh.pop %v1295
      %v1460 = vtanh.pop %v1298
      %v1461 = vtanh.pop %v1303
      %v1462 = vtanh.pop %v1306
      %v1463 = vtanh.pop %v1311
      %v1464 = vtanh.pop %v1314
      %v1465 = vtanh.pop %v1319
      %v1466 = vtanh.pop %v1322
      %v1467 = vtanh.pop %v1327
      %v1468 = vtanh.pop %v1330
      %v1469 = vtanh.pop %v1335
      %v1470 = vtanh.pop %v1338
      %v1471 = vtanh.pop %v1343
      %v1472 = vtanh.pop %v1346
      %v1473 = vtanh.pop %v1351
      %v1474 = vtanh.pop %v1354
      %v1475 = vtanh.pop %v1359
      %v1476 = vtanh.pop %v1362
      %v1477 = vtanh.pop %v1367
      %v1478 = vtanh.pop %v1370
      %v1479 = vtanh.pop %v1375
      %v1480 = vtanh.pop %v1378
      %v1481 = vtanh.pop %v1383
      %v1482 = vtanh.pop %v1386
      %v1483 = vtanh.pop %v1391
      %v1484 = vtanh.pop %v1394
      %v1485 = vtanh.pop %v1399
      %v1486 = vtanh.pop %v1402
      %v1487 = vtanh.pop %v1407
      %v1488 = vtanh.pop %v1410
      %v1489 = vtanh.pop %v1415
      %v1490 = vtanh.pop %v1418
      %v1491 = vtanh.pop %v1423
      %v1492 = vtanh.pop %v1426
      %v1493 = vpack.c.bf16 %v1430, %v1429
      %v1494 = vpack.c.bf16 %v1432, %v1431
      %v1495 = vpack.c.bf16 %v1434, %v1433
      %v1496 = vpack.c.bf16 %v1436, %v1435
      %v1497 = vpack.c.bf16 %v1438, %v1437
      %v1498 = vpack.c.bf16 %v1440, %v1439
      %v1499 = vpack.c.bf16 %v1442, %v1441
      %v1500 = vpack.c.bf16 %v1444, %v1443
      %v1501 = vpack.c.bf16 %v1446, %v1445
      %v1502 = vpack.c.bf16 %v1448, %v1447
      %v1503 = vpack.c.bf16 %v1450, %v1449
      %v1504 = vpack.c.bf16 %v1452, %v1451
      %v1505 = vpack.c.bf16 %v1454, %v1453
      %v1506 = vpack.c.bf16 %v1456, %v1455
      %v1507 = vpack.c.bf16 %v1458, %v1457
      %v1508 = vpack.c.bf16 %v1460, %v1459
      %v1509 = vpack.c.bf16 %v1462, %v1461
      %v1510 = vpack.c.bf16 %v1464, %v1463
      %v1511 = vpack.c.bf16 %v1466, %v1465
      %v1512 = vpack.c.bf16 %v1468, %v1467
      %v1513 = vpack.c.bf16 %v1470, %v1469
      %v1514 = vpack.c.bf16 %v1472, %v1471
      %v1515 = vpack.c.bf16 %v1474, %v1473
      %v1516 = vpack.c.bf16 %v1476, %v1475
      %v1517 = vpack.c.bf16 %v1478, %v1477
      %v1518 = vpack.c.bf16 %v1480, %v1479
      %v1519 = vpack.c.bf16 %v1482, %v1481
      %v1520 = vpack.c.bf16 %v1484, %v1483
      %v1521 = vpack.c.bf16 %v1486, %v1485
      %v1522 = vpack.c.bf16 %v1488, %v1487
      %v1523 = vpack.c.bf16 %v1490, %v1489
      %v1524 = vpack.c.bf16 %v1492, %v1491
      %v1525 = vld [vmem:[%s5] sm:$0xf]
      %v1526 = vld [vmem:[%s5 + $0x4] sm:$0xf]
      %v1527 = vld [vmem:[%s5 + $0x8] sm:$0xf]
      %v1528 = vld [vmem:[%s5 + $0xc] sm:$0xf]
      %v1529 = vld [vmem:[%s5 + $0x10] sm:$0xf]
      %v1530 = vld [vmem:[%s5 + $0x14] sm:$0xf]
      %v1531 = vld [vmem:[%s5 + $0x18] sm:$0xf]
      %v1532 = vld [vmem:[%s5 + $0x1c] sm:$0xf]
      %v1533 = vld [vmem:[%s6] sm:$0x1]
      %v1535 = vlaneseq
      %v1536 = vshrl.u32 %v1535, 7
      %v1537 = vsub.s32 0, %v1536
      %v1538 = vrot.slane %v1533, %v1537
      %v1548 = vunpack.c.l.b16 %v1525
      %v1549 = vunpack.c.l.b16 %v1526
      %v1550 = vunpack.c.l.b16 %v1527
      %v1551 = vunpack.c.l.b16 %v1528
      %v1552 = vunpack.c.l.b16 %v1529
      %v1553 = vunpack.c.l.b16 %v1530
      %v1554 = vunpack.c.l.b16 %v1531
      %v1555 = vunpack.c.l.b16 %v1532
      %v1556 = vpack.c.b16 %v1549, %v1548
      %v1557 = vpack.c.b16 %v1551, %v1550
      %v1558 = vpack.c.b16 %v1553, %v1552
      %v1559 = vpack.c.b16 %v1555, %v1554
      %v1565 = vsel %vm1043, %v1493, 0
      %v1568 = vsel %vm1043, %v1494, 0
      %v1571 = vsel %vm1043, %v1495, 0
      %v1574 = vsel %vm1043, %v1496, 0
      %v1577 = vsel %vm1043, %v1497, 0
      %v1580 = vsel %vm1043, %v1498, 0
      %v1583 = vsel %vm1043, %v1499, 0
      %v1586 = vsel %vm1043, %v1500, 0
      %v1589 = vsel %vm1043, %v1501, 0
      %v1592 = vsel %vm1043, %v1502, 0
      %v1595 = vsel %vm1043, %v1503, 0
      %v1598 = vsel %vm1043, %v1504, 0
      %v1601 = vsel %vm1043, %v1505, 0
      %v1604 = vsel %vm1043, %v1506, 0
      %v1607 = vsel %vm1043, %v1507, 0
      %v1610 = vsel %vm1043, %v1508, 0
      %v1613 = vsel %vm1043, %v1509, 0
      %v1616 = vsel %vm1043, %v1510, 0
      %v1619 = vsel %vm1043, %v1511, 0
      %v1622 = vsel %vm1043, %v1512, 0
      %v1625 = vsel %vm1043, %v1513, 0
      %v1628 = vsel %vm1043, %v1514, 0
      %v1631 = vsel %vm1043, %v1515, 0
      %v1634 = vsel %vm1043, %v1516, 0
      %v1637 = vsel %vm1043, %v1517, 0
      %v1640 = vsel %vm1043, %v1518, 0
      %v1643 = vsel %vm1043, %v1519, 0
      %v1646 = vsel %vm1043, %v1520, 0
      %v1649 = vsel %vm1043, %v1521, 0
      %v1652 = vsel %vm1043, %v1522, 0
      %v1655 = vsel %vm1043, %v1523, 0
      %v1658 = vsel %vm1043, %v1524, 0
      %1660 = vmatprep.subr.bf16.mxu0 0
      %1661 = vmatpush1.bf16.msra.mxu0 %v1556
      %1662 = vmatprep.subr.bf16.mxu0 0
      %1663 = vmatpush1.bf16.msra.mxu0 %v1557
      %1664 = vmatprep.subr.bf16.mxu0 0
      %1665 = vmatpush1.bf16.msra.mxu0 %v1558
      %1666 = vmatprep.subr.bf16.mxu0 0
      %1667 = vmatpush1.bf16.msra.mxu0 %v1559
      %1668 = vmatprep.subr.bf16.mxu0 0
      %1669 = vmatpush1.bf16.msra.mxu0 0
      %1670 = vmatprep.subr.bf16.mxu0 0
      %1671 = vmatpush1.bf16.msra.mxu0 0
      %1672 = vmatprep.subr.bf16.mxu0 0
      %1673 = vmatpush1.bf16.msra.mxu0 0
      %1674 = vmatprep.subr.bf16.mxu0 0
      %1675 = vmatpush1.bf16.msra.mxu0 0
      %1676 = vmatprep.subr.bf16.mxu0 0
      %1677 = vmatpush1.bf16.msra.mxu0 0
      %1678 = vmatprep.subr.bf16.mxu0 0
      %1679 = vmatpush1.bf16.msra.mxu0 0
      %1680 = vmatprep.subr.bf16.mxu0 0
      %1681 = vmatpush1.bf16.msra.mxu0 0
      %1682 = vmatprep.subr.bf16.mxu0 0
      %1683 = vmatpush1.bf16.msra.mxu0 0
      %1684 = vmatprep.subr.bf16.mxu0 0
      %1685 = vmatpush1.bf16.msra.mxu0 0
      %1686 = vmatprep.subr.bf16.mxu0 0
      %1687 = vmatpush1.bf16.msra.mxu0 0
      %1688 = vmatprep.subr.bf16.mxu0 0
      %1689 = vmatpush1.bf16.msra.mxu0 0
      %1690 = vmatprep.subr.bf16.mxu0 0
      %1691 = vmatpush1.bf16.msra.mxu0 0
      %1692 = vmatprep.mubr.bf16.mxu0 0
      %1693 = vmatmul.mubr.bf16.gmra.mrb[0].mxu0 %v1565
      %v1694 = vpop.f32.mrb[0].mxu0
      %v1695 = vadd.f32 %v1538, %v1694
      %v1696 = vpop.f32.mrb[0].mxu0
      %v1697 = vpop.f32.mrb[0].mxu0
      %v1698 = vadd.f32 %v1538, %v1697
      %v1699 = vpop.f32.mrb[0].mxu0
      %1700 = vmatprep.mubr.bf16.mxu0 0
      %1701 = vmatmul.mubr.bf16.gmra.mrb[0].mxu0 %v1568
      %v1702 = vpop.f32.mrb[0].mxu0
      %v1703 = vadd.f32 %v1538, %v1702
      %v1704 = vpop.f32.mrb[0].mxu0
      %v1705 = vpop.f32.mrb[0].mxu0
      %v1706 = vadd.f32 %v1538, %v1705
      %v1707 = vpop.f32.mrb[0].mxu0
      %1708 = vmatprep.mubr.bf16.mxu0 0
      %1709 = vmatmul.mubr.bf16.gmra.mrb[0].mxu0 %v1571
      %v1710 = vpop.f32.mrb[0].mxu0
      %v1711 = vadd.f32 %v1538, %v1710
      %v1712 = vpop.f32.mrb[0].mxu0
      %v1713 = vpop.f32.mrb[0].mxu0
      %v1714 = vadd.f32 %v1538, %v1713
      %v1715 = vpop.f32.mrb[0].mxu0
      %1716 = vmatprep.mubr.bf16.mxu0 0
      %1717 = vmatmul.mubr.bf16.gmra.mrb[0].mxu0 %v1574
      %v1718 = vpop.f32.mrb[0].mxu0
      %v1719 = vadd.f32 %v1538, %v1718
      %v1720 = vpop.f32.mrb[0].mxu0
      %v1721 = vpop.f32.mrb[0].mxu0
      %v1722 = vadd.f32 %v1538, %v1721
      %v1723 = vpop.f32.mrb[0].mxu0
      %1724 = vmatprep.mubr.bf16.mxu0 0
      %1725 = vmatmul.mubr.bf16.gmra.mrb[0].mxu0 %v1577
      %v1726 = vpop.f32.mrb[0].mxu0
      %v1727 = vadd.f32 %v1538, %v1726
      %v1728 = vpop.f32.mrb[0].mxu0
      %v1729 = vpop.f32.mrb[0].mxu0
      %v1730 = vadd.f32 %v1538, %v1729
      %v1731 = vpop.f32.mrb[0].mxu0
      %1732 = vmatprep.mubr.bf16.mxu0 0
      %1733 = vmatmul.mubr.bf16.gmra.mrb[0].mxu0 %v1580
      %v1734 = vpop.f32.mrb[0].mxu0
      %v1735 = vadd.f32 %v1538, %v1734
      %v1736 = vpop.f32.mrb[0].mxu0
      %v1737 = vpop.f32.mrb[0].mxu0
      %v1738 = vadd.f32 %v1538, %v1737
      %v1739 = vpop.f32.mrb[0].mxu0
      %1740 = vmatprep.mubr.bf16.mxu0 0
      %1741 = vmatmul.mubr.bf16.gmra.mrb[0].mxu0 %v1583
      %v1742 = vpop.f32.mrb[0].mxu0
      %v1743 = vadd.f32 %v1538, %v1742
      %v1744 = vpop.f32.mrb[0].mxu0
      %v1745 = vpop.f32.mrb[0].mxu0
      %v1746 = vadd.f32 %v1538, %v1745
      %v1747 = vpop.f32.mrb[0].mxu0
      %1748 = vmatprep.mubr.bf16.mxu0 0
      %1749 = vmatmul.mubr.bf16.gmra.mrb[0].mxu0 %v1586
      %v1750 = vpop.f32.mrb[0].mxu0
      %v1751 = vadd.f32 %v1538, %v1750
      %v1752 = vpop.f32.mrb[0].mxu0
      %v1753 = vpop.f32.mrb[0].mxu0
      %v1754 = vadd.f32 %v1538, %v1753
      %v1755 = vpop.f32.mrb[0].mxu0
      %1756 = vmatprep.mubr.bf16.mxu0 0
      %1757 = vmatmul.mubr.bf16.gmra.mrb[0].mxu0 %v1589
      %v1758 = vpop.f32.mrb[0].mxu0
      %v1759 = vadd.f32 %v1538, %v1758
      %v1760 = vpop.f32.mrb[0].mxu0
      %v1761 = vpop.f32.mrb[0].mxu0
      %v1762 = vadd.f32 %v1538, %v1761
      %v1763 = vpop.f32.mrb[0].mxu0
      %1764 = vmatprep.mubr.bf16.mxu0 0
      %1765 = vmatmul.mubr.bf16.gmra.mrb[0].mxu0 %v1592
      %v1766 = vpop.f32.mrb[0].mxu0
      %v1767 = vadd.f32 %v1538, %v1766
      %v1768 = vpop.f32.mrb[0].mxu0
      %v1769 = vpop.f32.mrb[0].mxu0
      %v1770 = vadd.f32 %v1538, %v1769
      %v1771 = vpop.f32.mrb[0].mxu0
      %1772 = vmatprep.mubr.bf16.mxu0 0
      %1773 = vmatmul.mubr.bf16.gmra.mrb[0].mxu0 %v1595
      %v1774 = vpop.f32.mrb[0].mxu0
      %v1775 = vadd.f32 %v1538, %v1774
      %v1776 = vpop.f32.mrb[0].mxu0
      %v1777 = vpop.f32.mrb[0].mxu0
      %v1778 = vadd.f32 %v1538, %v1777
      %v1779 = vpop.f32.mrb[0].mxu0
      %1780 = vmatprep.mubr.bf16.mxu0 0
      %1781 = vmatmul.mubr.bf16.gmra.mrb[0].mxu0 %v1598
      %v1782 = vpop.f32.mrb[0].mxu0
      %v1783 = vadd.f32 %v1538, %v1782
      %v1784 = vpop.f32.mrb[0].mxu0
      %v1785 = vpop.f32.mrb[0].mxu0
      %v1786 = vadd.f32 %v1538, %v1785
      %v1787 = vpop.f32.mrb[0].mxu0
      %1788 = vmatprep.mubr.bf16.mxu0 0
      %1789 = vmatmul.mubr.bf16.gmra.mrb[0].mxu0 %v1601
      %v1790 = vpop.f32.mrb[0].mxu0
      %v1791 = vadd.f32 %v1538, %v1790
      %v1792 = vpop.f32.mrb[0].mxu0
      %v1793 = vpop.f32.mrb[0].mxu0
      %v1794 = vadd.f32 %v1538, %v1793
      %v1795 = vpop.f32.mrb[0].mxu0
      %1796 = vmatprep.mubr.bf16.mxu0 0
      %1797 = vmatmul.mubr.bf16.gmra.mrb[0].mxu0 %v1604
      %v1798 = vpop.f32.mrb[0].mxu0
      %v1799 = vadd.f32 %v1538, %v1798
      %v1800 = vpop.f32.mrb[0].mxu0
      %v1801 = vpop.f32.mrb[0].mxu0
      %v1802 = vadd.f32 %v1538, %v1801
      %v1803 = vpop.f32.mrb[0].mxu0
      %1804 = vmatprep.mubr.bf16.mxu0 0
      %1805 = vmatmul.mubr.bf16.gmra.mrb[0].mxu0 %v1607
      %v1806 = vpop.f32.mrb[0].mxu0
      %v1807 = vadd.f32 %v1538, %v1806
      %v1808 = vpop.f32.mrb[0].mxu0
      %v1809 = vpop.f32.mrb[0].mxu0
      %v1810 = vadd.f32 %v1538, %v1809
      %v1811 = vpop.f32.mrb[0].mxu0
      %1812 = vmatprep.mubr.bf16.mxu0 0
      %1813 = vmatmul.mubr.bf16.gmra.mrb[0].mxu0 %v1610
      %v1814 = vpop.f32.mrb[0].mxu0
      %v1815 = vadd.f32 %v1538, %v1814
      %v1816 = vpop.f32.mrb[0].mxu0
      %v1817 = vpop.f32.mrb[0].mxu0
      %v1818 = vadd.f32 %v1538, %v1817
      %v1819 = vpop.f32.mrb[0].mxu0
      %1820 = vmatprep.mubr.bf16.mxu0 0
      %1821 = vmatmul.mubr.bf16.gmra.mrb[0].mxu0 %v1613
      %v1822 = vpop.f32.mrb[0].mxu0
      %v1823 = vadd.f32 %v1538, %v1822
      %v1824 = vpop.f32.mrb[0].mxu0
      %v1825 = vpop.f32.mrb[0].mxu0
      %v1826 = vadd.f32 %v1538, %v1825
      %v1827 = vpop.f32.mrb[0].mxu0
      %1828 = vmatprep.mubr.bf16.mxu0 0
      %1829 = vmatmul.mubr.bf16.gmra.mrb[0].mxu0 %v1616
      %v1830 = vpop.f32.mrb[0].mxu0
      %v1831 = vadd.f32 %v1538, %v1830
      %v1832 = vpop.f32.mrb[0].mxu0
      %v1833 = vpop.f32.mrb[0].mxu0
      %v1834 = vadd.f32 %v1538, %v1833
      %v1835 = vpop.f32.mrb[0].mxu0
      %1836 = vmatprep.mubr.bf16.mxu0 0
      %1837 = vmatmul.mubr.bf16.gmra.mrb[0].mxu0 %v1619
      %v1838 = vpop.f32.mrb[0].mxu0
      %v1839 = vadd.f32 %v1538, %v1838
      %v1840 = vpop.f32.mrb[0].mxu0
      %v1841 = vpop.f32.mrb[0].mxu0
      %v1842 = vadd.f32 %v1538, %v1841
      %v1843 = vpop.f32.mrb[0].mxu0
      %1844 = vmatprep.mubr.bf16.mxu0 0
      %1845 = vmatmul.mubr.bf16.gmra.mrb[0].mxu0 %v1622
      %v1846 = vpop.f32.mrb[0].mxu0
      %v1847 = vadd.f32 %v1538, %v1846
      %v1848 = vpop.f32.mrb[0].mxu0
      %v1849 = vpop.f32.mrb[0].mxu0
      %v1850 = vadd.f32 %v1538, %v1849
      %v1851 = vpop.f32.mrb[0].mxu0
      %1852 = vmatprep.mubr.bf16.mxu0 0
      %1853 = vmatmul.mubr.bf16.gmra.mrb[0].mxu0 %v1625
      %v1854 = vpop.f32.mrb[0].mxu0
      %v1855 = vadd.f32 %v1538, %v1854
      %v1856 = vpop.f32.mrb[0].mxu0
      %v1857 = vpop.f32.mrb[0].mxu0
      %v1858 = vadd.f32 %v1538, %v1857
      %v1859 = vpop.f32.mrb[0].mxu0
      %1860 = vmatprep.mubr.bf16.mxu0 0
      %1861 = vmatmul.mubr.bf16.gmra.mrb[0].mxu0 %v1628
      %v1862 = vpop.f32.mrb[0].mxu0
      %v1863 = vadd.f32 %v1538, %v1862
      %v1864 = vpop.f32.mrb[0].mxu0
      %v1865 = vpop.f32.mrb[0].mxu0
      %v1866 = vadd.f32 %v1538, %v1865
      %v1867 = vpop.f32.mrb[0].mxu0
      %1868 = vmatprep.mubr.bf16.mxu0 0
      %1869 = vmatmul.mubr.bf16.gmra.mrb[0].mxu0 %v1631
      %v1870 = vpop.f32.mrb[0].mxu0
      %v1871 = vadd.f32 %v1538, %v1870
      %v1872 = vpop.f32.mrb[0].mxu0
      %v1873 = vpop.f32.mrb[0].mxu0
      %v1874 = vadd.f32 %v1538, %v1873
      %v1875 = vpop.f32.mrb[0].mxu0
      %1876 = vmatprep.mubr.bf16.mxu0 0
      %1877 = vmatmul.mubr.bf16.gmra.mrb[0].mxu0 %v1634
      %v1878 = vpop.f32.mrb[0].mxu0
      %v1879 = vadd.f32 %v1538, %v1878
      %v1880 = vpop.f32.mrb[0].mxu0
      %v1881 = vpop.f32.mrb[0].mxu0
      %v1882 = vadd.f32 %v1538, %v1881
      %v1883 = vpop.f32.mrb[0].mxu0
      %1884 = vmatprep.mubr.bf16.mxu0 0
      %1885 = vmatmul.mubr.bf16.gmra.mrb[0].mxu0 %v1637
      %v1886 = vpop.f32.mrb[0].mxu0
      %v1887 = vadd.f32 %v1538, %v1886
      %v1888 = vpop.f32.mrb[0].mxu0
      %v1889 = vpop.f32.mrb[0].mxu0
      %v1890 = vadd.f32 %v1538, %v1889
      %v1891 = vpop.f32.mrb[0].mxu0
      %1892 = vmatprep.mubr.bf16.mxu0 0
      %1893 = vmatmul.mubr.bf16.gmra.mrb[0].mxu0 %v1640
      %v1894 = vpop.f32.mrb[0].mxu0
      %v1895 = vadd.f32 %v1538, %v1894
      %v1896 = vpop.f32.mrb[0].mxu0
      %v1897 = vpop.f32.mrb[0].mxu0
      %v1898 = vadd.f32 %v1538, %v1897
      %v1899 = vpop.f32.mrb[0].mxu0
      %1900 = vmatprep.mubr.bf16.mxu0 0
      %1901 = vmatmul.mubr.bf16.gmra.mrb[0].mxu0 %v1643
      %v1902 = vpop.f32.mrb[0].mxu0
      %v1903 = vadd.f32 %v1538, %v1902
      %v1904 = vpop.f32.mrb[0].mxu0
      %v1905 = vpop.f32.mrb[0].mxu0
      %v1906 = vadd.f32 %v1538, %v1905
      %v1907 = vpop.f32.mrb[0].mxu0
      %1908 = vmatprep.mubr.bf16.mxu0 0
      %1909 = vmatmul.mubr.bf16.gmra.mrb[0].mxu0 %v1646
      %v1910 = vpop.f32.mrb[0].mxu0
      %v1911 = vadd.f32 %v1538, %v1910
      %v1912 = vpop.f32.mrb[0].mxu0
      %v1913 = vpop.f32.mrb[0].mxu0
      %v1914 = vadd.f32 %v1538, %v1913
      %v1915 = vpop.f32.mrb[0].mxu0
      %1916 = vmatprep.mubr.bf16.mxu0 0
      %1917 = vmatmul.mubr.bf16.gmra.mrb[0].mxu0 %v1649
      %v1918 = vpop.f32.mrb[0].mxu0
      %v1919 = vadd.f32 %v1538, %v1918
      %v1920 = vpop.f32.mrb[0].mxu0
      %v1921 = vpop.f32.mrb[0].mxu0
      %v1922 = vadd.f32 %v1538, %v1921
      %v1923 = vpop.f32.mrb[0].mxu0
      %1924 = vmatprep.mubr.bf16.mxu0 0
      %1925 = vmatmul.mubr.bf16.gmra.mrb[0].mxu0 %v1652
      %v1926 = vpop.f32.mrb[0].mxu0
      %v1927 = vadd.f32 %v1538, %v1926
      %v1928 = vpop.f32.mrb[0].mxu0
      %v1929 = vpop.f32.mrb[0].mxu0
      %v1930 = vadd.f32 %v1538, %v1929
      %v1931 = vpop.f32.mrb[0].mxu0
      %1932 = vmatprep.mubr.bf16.mxu0 0
      %1933 = vmatmul.mubr.bf16.gmra.mrb[0].mxu0 %v1655
      %v1934 = vpop.f32.mrb[0].mxu0
      %v1935 = vadd.f32 %v1538, %v1934
      %v1936 = vpop.f32.mrb[0].mxu0
      %v1937 = vpop.f32.mrb[0].mxu0
      %v1938 = vadd.f32 %v1538, %v1937
      %v1939 = vpop.f32.mrb[0].mxu0
      %1940 = vmatprep.mubr.bf16.mxu0 0
      %1941 = vmatmul.mubr.bf16.gmra.mrb[0].mxu0 %v1658
      %v1942 = vpop.f32.mrb[0].mxu0
      %v1943 = vadd.f32 %v1538, %v1942
      %v1944 = vpop.f32.mrb[0].mxu0
      %v1945 = vpop.f32.mrb[0].mxu0
      %v1946 = vadd.f32 %v1538, %v1945
      %v1947 = vpop.f32.mrb[0].mxu0
      %1948 = vdwg.mxu0
      %1949 = vmax.xlane.f32.xlu0 %v1695
      %v1950 = vpop.xlane.xlu0 %1949
      %1951 = vmax.xlane.f32.xlu0 %v1698
      %v1952 = vpop.xlane.xlu0 %1951
      %1953 = vmax.xlane.f32.xlu0 %v1703
      %v1954 = vpop.xlane.xlu0 %1953
      %1955 = vmax.xlane.f32.xlu0 %v1706
      %v1956 = vpop.xlane.xlu0 %1955
      %1957 = vmax.xlane.f32.xlu0 %v1711
      %v1958 = vpop.xlane.xlu0 %1957
      %1959 = vmax.xlane.f32.xlu0 %v1714
      %v1960 = vpop.xlane.xlu0 %1959
      %1961 = vmax.xlane.f32.xlu0 %v1719
      %v1962 = vpop.xlane.xlu0 %1961
      %1963 = vmax.xlane.f32.xlu0 %v1722
      %v1964 = vpop.xlane.xlu0 %1963
      %1965 = vmax.xlane.f32.xlu0 %v1727
      %v1966 = vpop.xlane.xlu0 %1965
      %1967 = vmax.xlane.f32.xlu0 %v1730
      %v1968 = vpop.xlane.xlu0 %1967
      %1969 = vmax.xlane.f32.xlu0 %v1735
      %v1970 = vpop.xlane.xlu0 %1969
      %1971 = vmax.xlane.f32.xlu0 %v1738
      %v1972 = vpop.xlane.xlu0 %1971
      %1973 = vmax.xlane.f32.xlu0 %v1743
      %v1974 = vpop.xlane.xlu0 %1973
      %1975 = vmax.xlane.f32.xlu0 %v1746
      %v1976 = vpop.xlane.xlu0 %1975
      %1977 = vmax.xlane.f32.xlu0 %v1751
      %v1978 = vpop.xlane.xlu0 %1977
      %1979 = vmax.xlane.f32.xlu0 %v1754
      %v1980 = vpop.xlane.xlu0 %1979
      %1981 = vmax.xlane.f32.xlu0 %v1759
      %v1982 = vpop.xlane.xlu0 %1981
      %1983 = vmax.xlane.f32.xlu0 %v1762
      %v1984 = vpop.xlane.xlu0 %1983
      %1985 = vmax.xlane.f32.xlu0 %v1767
      %v1986 = vpop.xlane.xlu0 %1985
      %1987 = vmax.xlane.f32.xlu0 %v1770
      %v1988 = vpop.xlane.xlu0 %1987
      %1989 = vmax.xlane.f32.xlu0 %v1775
      %v1990 = vpop.xlane.xlu0 %1989
      %1991 = vmax.xlane.f32.xlu0 %v1778
      %v1992 = vpop.xlane.xlu0 %1991
      %1993 = vmax.xlane.f32.xlu0 %v1783
      %v1994 = vpop.xlane.xlu0 %1993
      %1995 = vmax.xlane.f32.xlu0 %v1786
      %v1996 = vpop.xlane.xlu0 %1995
      %1997 = vmax.xlane.f32.xlu0 %v1791
      %v1998 = vpop.xlane.xlu0 %1997
      %1999 = vmax.xlane.f32.xlu0 %v1794
      %v2000 = vpop.xlane.xlu0 %1999
      %2001 = vmax.xlane.f32.xlu0 %v1799
      %v2002 = vpop.xlane.xlu0 %2001
      %2003 = vmax.xlane.f32.xlu0 %v1802
      %v2004 = vpop.xlane.xlu0 %2003
      %2005 = vmax.xlane.f32.xlu0 %v1807
      %v2006 = vpop.xlane.xlu0 %2005
      %2007 = vmax.xlane.f32.xlu0 %v1810
      %v2008 = vpop.xlane.xlu0 %2007
      %2009 = vmax.xlane.f32.xlu0 %v1815
      %v2010 = vpop.xlane.xlu0 %2009
      %2011 = vmax.xlane.f32.xlu0 %v1818
      %v2012 = vpop.xlane.xlu0 %2011
      %2013 = vmax.xlane.f32.xlu0 %v1823
      %v2014 = vpop.xlane.xlu0 %2013
      %2015 = vmax.xlane.f32.xlu0 %v1826
      %v2016 = vpop.xlane.xlu0 %2015
      %2017 = vmax.xlane.f32.xlu0 %v1831
      %v2018 = vpop.xlane.xlu0 %2017
      %2019 = vmax.xlane.f32.xlu0 %v1834
      %v2020 = vpop.xlane.xlu0 %2019
      %2021 = vmax.xlane.f32.xlu0 %v1839
      %v2022 = vpop.xlane.xlu0 %2021
      %2023 = vmax.xlane.f32.xlu0 %v1842
      %v2024 = vpop.xlane.xlu0 %2023
      %2025 = vmax.xlane.f32.xlu0 %v1847
      %v2026 = vpop.xlane.xlu0 %2025
      %2027 = vmax.xlane.f32.xlu0 %v1850
      %v2028 = vpop.xlane.xlu0 %2027
      %2029 = vmax.xlane.f32.xlu0 %v1855
      %v2030 = vpop.xlane.xlu0 %2029
      %2031 = vmax.xlane.f32.xlu0 %v1858
      %v2032 = vpop.xlane.xlu0 %2031
      %2033 = vmax.xlane.f32.xlu0 %v1863
      %v2034 = vpop.xlane.xlu0 %2033
      %2035 = vmax.xlane.f32.xlu0 %v1866
      %v2036 = vpop.xlane.xlu0 %2035
      %2037 = vmax.xlane.f32.xlu0 %v1871
      %v2038 = vpop.xlane.xlu0 %2037
      %2039 = vmax.xlane.f32.xlu0 %v1874
      %v2040 = vpop.xlane.xlu0 %2039
      %2041 = vmax.xlane.f32.xlu0 %v1879
      %v2042 = vpop.xlane.xlu0 %2041
      %2043 = vmax.xlane.f32.xlu0 %v1882
      %v2044 = vpop.xlane.xlu0 %2043
      %2045 = vmax.xlane.f32.xlu0 %v1887
      %v2046 = vpop.xlane.xlu0 %2045
      %2047 = vmax.xlane.f32.xlu0 %v1890
      %v2048 = vpop.xlane.xlu0 %2047
      %2049 = vmax.xlane.f32.xlu0 %v1895
      %v2050 = vpop.xlane.xlu0 %2049
      %2051 = vmax.xlane.f32.xlu0 %v1898
      %v2052 = vpop.xlane.xlu0 %2051
      %2053 = vmax.xlane.f32.xlu0 %v1903
      %v2054 = vpop.xlane.xlu0 %2053
      %2055 = vmax.xlane.f32.xlu0 %v1906
      %v2056 = vpop.xlane.xlu0 %2055
      %2057 = vmax.xlane.f32.xlu0 %v1911
      %v2058 = vpop.xlane.xlu0 %2057
      %2059 = vmax.xlane.f32.xlu0 %v1914
      %v2060 = vpop.xlane.xlu0 %2059
      %2061 = vmax.xlane.f32.xlu0 %v1919
      %v2062 = vpop.xlane.xlu0 %2061
      %2063 = vmax.xlane.f32.xlu0 %v1922
      %v2064 = vpop.xlane.xlu0 %2063
      %2065 = vmax.xlane.f32.xlu0 %v1927
      %v2066 = vpop.xlane.xlu0 %2065
      %2067 = vmax.xlane.f32.xlu0 %v1930
      %v2068 = vpop.xlane.xlu0 %2067
      %2069 = vmax.xlane.f32.xlu0 %v1935
      %v2070 = vpop.xlane.xlu0 %2069
      %2071 = vmax.xlane.f32.xlu0 %v1938
      %v2072 = vpop.xlane.xlu0 %2071
      %2073 = vmax.xlane.f32.xlu0 %v1943
      %v2074 = vpop.xlane.xlu0 %2073
      %2075 = vmax.xlane.f32.xlu0 %v1946
      %v2076 = vpop.xlane.xlu0 %2075
      %v2077 = vsub.f32 %v1695, %v1950
      %v2078 = vsub.f32 %v1698, %v1952
      %v2079 = vsub.f32 %v1703, %v1954
      %v2080 = vsub.f32 %v1706, %v1956
      %v2081 = vsub.f32 %v1711, %v1958
      %v2082 = vsub.f32 %v1714, %v1960
      %v2083 = vsub.f32 %v1719, %v1962
      %v2084 = vsub.f32 %v1722, %v1964
      %v2085 = vsub.f32 %v1727, %v1966
      %v2086 = vsub.f32 %v1730, %v1968
      %v2087 = vsub.f32 %v1735, %v1970
      %v2088 = vsub.f32 %v1738, %v1972
      %v2089 = vsub.f32 %v1743, %v1974
      %v2090 = vsub.f32 %v1746, %v1976
      %v2091 = vsub.f32 %v1751, %v1978
      %v2092 = vsub.f32 %v1754, %v1980
      %v2093 = vsub.f32 %v1759, %v1982
      %v2094 = vsub.f32 %v1762, %v1984
      %v2095 = vsub.f32 %v1767, %v1986
      %v2096 = vsub.f32 %v1770, %v1988
      %v2097 = vsub.f32 %v1775, %v1990
      %v2098 = vsub.f32 %v1778, %v1992
      %v2099 = vsub.f32 %v1783, %v1994
      %v2100 = vsub.f32 %v1786, %v1996
      %v2101 = vsub.f32 %v1791, %v1998
      %v2102 = vsub.f32 %v1794, %v2000
      %v2103 = vsub.f32 %v1799, %v2002
      %v2104 = vsub.f32 %v1802, %v2004
      %v2105 = vsub.f32 %v1807, %v2006
      %v2106 = vsub.f32 %v1810, %v2008
      %v2107 = vsub.f32 %v1815, %v2010
      %v2108 = vsub.f32 %v1818, %v2012
      %v2109 = vsub.f32 %v1823, %v2014
      %v2110 = vsub.f32 %v1826, %v2016
      %v2111 = vsub.f32 %v1831, %v2018
      %v2112 = vsub.f32 %v1834, %v2020
      %v2113 = vsub.f32 %v1839, %v2022
      %v2114 = vsub.f32 %v1842, %v2024
      %v2115 = vsub.f32 %v1847, %v2026
      %v2116 = vsub.f32 %v1850, %v2028
      %v2117 = vsub.f32 %v1855, %v2030
      %v2118 = vsub.f32 %v1858, %v2032
      %v2119 = vsub.f32 %v1863, %v2034
      %v2120 = vsub.f32 %v1866, %v2036
      %v2121 = vsub.f32 %v1871, %v2038
      %v2122 = vsub.f32 %v1874, %v2040
      %v2123 = vsub.f32 %v1879, %v2042
      %v2124 = vsub.f32 %v1882, %v2044
      %v2125 = vsub.f32 %v1887, %v2046
      %v2126 = vsub.f32 %v1890, %v2048
      %v2127 = vsub.f32 %v1895, %v2050
      %v2128 = vsub.f32 %v1898, %v2052
      %v2129 = vsub.f32 %v1903, %v2054
      %v2130 = vsub.f32 %v1906, %v2056
      %v2131 = vsub.f32 %v1911, %v2058
      %v2132 = vsub.f32 %v1914, %v2060
      %v2133 = vsub.f32 %v1919, %v2062
      %v2134 = vsub.f32 %v1922, %v2064
      %v2135 = vsub.f32 %v1927, %v2066
      %v2136 = vsub.f32 %v1930, %v2068
      %v2137 = vsub.f32 %v1935, %v2070
      %v2138 = vsub.f32 %v1938, %v2072
      %v2139 = vsub.f32 %v1943, %v2074
      %v2140 = vsub.f32 %v1946, %v2076
      %v2141 = vmul.f32 %v2077, 1.442695
      %v2142 = vpow.pop %v2141
      %v2143 = vmul.f32 %v2078, 1.442695
      %v2144 = vpow.pop %v2143
      %v2145 = vmul.f32 %v2079, 1.442695
      %v2146 = vpow.pop %v2145
      %v2147 = vmul.f32 %v2080, 1.442695
      %v2148 = vpow.pop %v2147
      %v2149 = vmul.f32 %v2081, 1.442695
      %v2150 = vpow.pop %v2149
      %v2151 = vmul.f32 %v2082, 1.442695
      %v2152 = vpow.pop %v2151
      %v2153 = vmul.f32 %v2083, 1.442695
      %v2154 = vpow.pop %v2153
      %v2155 = vmul.f32 %v2084, 1.442695
      %v2156 = vpow.pop %v2155
      %v2157 = vmul.f32 %v2085, 1.442695
      %v2158 = vpow.pop %v2157
      %v2159 = vmul.f32 %v2086, 1.442695
      %v2160 = vpow.pop %v2159
      %v2161 = vmul.f32 %v2087, 1.442695
      %v2162 = vpow.pop %v2161
      %v2163 = vmul.f32 %v2088, 1.442695
      %v2164 = vpow.pop %v2163
      %v2165 = vmul.f32 %v2089, 1.442695
      %v2166 = vpow.pop %v2165
      %v2167 = vmul.f32 %v2090, 1.442695
      %v2168 = vpow.pop %v2167
      %v2169 = vmul.f32 %v2091, 1.442695
      %v2170 = vpow.pop %v2169
      %v2171 = vmul.f32 %v2092, 1.442695
      %v2172 = vpow.pop %v2171
      %v2173 = vmul.f32 %v2093, 1.442695
      %v2174 = vpow.pop %v2173
      %v2175 = vmul.f32 %v2094, 1.442695
      %v2176 = vpow.pop %v2175
      %v2177 = vmul.f32 %v2095, 1.442695
      %v2178 = vpow.pop %v2177
      %v2179 = vmul.f32 %v2096, 1.442695
      %v2180 = vpow.pop %v2179
      %v2181 = vmul.f32 %v2097, 1.442695
      %v2182 = vpow.pop %v2181
      %v2183 = vmul.f32 %v2098, 1.442695
      %v2184 = vpow.pop %v2183
      %v2185 = vmul.f32 %v2099, 1.442695
      %v2186 = vpow.pop %v2185
      %v2187 = vmul.f32 %v2100, 1.442695
      %v2188 = vpow.pop %v2187
      %v2189 = vmul.f32 %v2101, 1.442695
      %v2190 = vpow.pop %v2189
      %v2191 = vmul.f32 %v2102, 1.442695
      %v2192 = vpow.pop %v2191
      %v2193 = vmul.f32 %v2103, 1.442695
      %v2194 = vpow.pop %v2193
      %v2195 = vmul.f32 %v2104, 1.442695
      %v2196 = vpow.pop %v2195
      %v2197 = vmul.f32 %v2105, 1.442695
      %v2198 = vpow.pop %v2197
      %v2199 = vmul.f32 %v2106, 1.442695
      %v2200 = vpow.pop %v2199
      %v2201 = vmul.f32 %v2107, 1.442695
      %v2202 = vpow.pop %v2201
      %v2203 = vmul.f32 %v2108, 1.442695
      %v2204 = vpow.pop %v2203
      %v2205 = vmul.f32 %v2109, 1.442695
      %v2206 = vpow.pop %v2205
      %v2207 = vmul.f32 %v2110, 1.442695
      %v2208 = vpow.pop %v2207
      %v2209 = vmul.f32 %v2111, 1.442695
      %v2210 = vpow.pop %v2209
      %v2211 = vmul.f32 %v2112, 1.442695
      %v2212 = vpow.pop %v2211
      %v2213 = vmul.f32 %v2113, 1.442695
      %v2214 = vpow.pop %v2213
      %v2215 = vmul.f32 %v2114, 1.442695
      %v2216 = vpow.pop %v2215
      %v2217 = vmul.f32 %v2115, 1.442695
      %v2218 = vpow.pop %v2217
      %v2219 = vmul.f32 %v2116, 1.442695
      %v2220 = vpow.pop %v2219
      %v2221 = vmul.f32 %v2117, 1.442695
      %v2222 = vpow.pop %v2221
      %v2223 = vmul.f32 %v2118, 1.442695
      %v2224 = vpow.pop %v2223
      %v2225 = vmul.f32 %v2119, 1.442695
      %v2226 = vpow.pop %v2225
      %v2227 = vmul.f32 %v2120, 1.442695
      %v2228 = vpow.pop %v2227
      %v2229 = vmul.f32 %v2121, 1.442695
      %v2230 = vpow.pop %v2229
      %v2231 = vmul.f32 %v2122, 1.442695
      %v2232 = vpow.pop %v2231
      %v2233 = vmul.f32 %v2123, 1.442695
      %v2234 = vpow.pop %v2233
      %v2235 = vmul.f32 %v2124, 1.442695
      %v2236 = vpow.pop %v2235
      %v2237 = vmul.f32 %v2125, 1.442695
      %v2238 = vpow.pop %v2237
      %v2239 = vmul.f32 %v2126, 1.442695
      %v2240 = vpow.pop %v2239
      %v2241 = vmul.f32 %v2127, 1.442695
      %v2242 = vpow.pop %v2241
      %v2243 = vmul.f32 %v2128, 1.442695
      %v2244 = vpow.pop %v2243
      %v2245 = vmul.f32 %v2129, 1.442695
      %v2246 = vpow.pop %v2245
      %v2247 = vmul.f32 %v2130, 1.442695
      %v2248 = vpow.pop %v2247
      %v2249 = vmul.f32 %v2131, 1.442695
      %v2250 = vpow.pop %v2249
      %v2251 = vmul.f32 %v2132, 1.442695
      %v2252 = vpow.pop %v2251
      %v2253 = vmul.f32 %v2133, 1.442695
      %v2254 = vpow.pop %v2253
      %v2255 = vmul.f32 %v2134, 1.442695
      %v2256 = vpow.pop %v2255
      %v2257 = vmul.f32 %v2135, 1.442695
      %v2258 = vpow.pop %v2257
      %v2259 = vmul.f32 %v2136, 1.442695
      %v2260 = vpow.pop %v2259
      %v2261 = vmul.f32 %v2137, 1.442695
      %v2262 = vpow.pop %v2261
      %v2263 = vmul.f32 %v2138, 1.442695
      %v2264 = vpow.pop %v2263
      %v2265 = vmul.f32 %v2139, 1.442695
      %v2266 = vpow.pop %v2265
      %v2267 = vmul.f32 %v2140, 1.442695
      %v2268 = vpow.pop %v2267
      %2269 = vadd.xlane.f32.xlu0 %v2142
      %v2270 = vpop.xlane.xlu0 %2269
      %2271 = vadd.xlane.f32.xlu0 %v2144
      %v2272 = vpop.xlane.xlu0 %2271
      %2273 = vadd.xlane.f32.xlu0 %v2146
      %v2274 = vpop.xlane.xlu0 %2273
      %2275 = vadd.xlane.f32.xlu0 %v2148
      %v2276 = vpop.xlane.xlu0 %2275
      %2277 = vadd.xlane.f32.xlu0 %v2150
      %v2278 = vpop.xlane.xlu0 %2277
      %2279 = vadd.xlane.f32.xlu0 %v2152
      %v2280 = vpop.xlane.xlu0 %2279
      %2281 = vadd.xlane.f32.xlu0 %v2154
      %v2282 = vpop.xlane.xlu0 %2281
      %2283 = vadd.xlane.f32.xlu0 %v2156
      %v2284 = vpop.xlane.xlu0 %2283
      %2285 = vadd.xlane.f32.xlu0 %v2158
      %v2286 = vpop.xlane.xlu0 %2285
      %2287 = vadd.xlane.f32.xlu0 %v2160
      %v2288 = vpop.xlane.xlu0 %2287
      %2289 = vadd.xlane.f32.xlu0 %v2162
      %v2290 = vpop.xlane.xlu0 %2289
      %2291 = vadd.xlane.f32.xlu0 %v2164
      %v2292 = vpop.xlane.xlu0 %2291
      %2293 = vadd.xlane.f32.xlu0 %v2166
      %v2294 = vpop.xlane.xlu0 %2293
      %2295 = vadd.xlane.f32.xlu0 %v2168
      %v2296 = vpop.xlane.xlu0 %2295
      %2297 = vadd.xlane.f32.xlu0 %v2170
      %v2298 = vpop.xlane.xlu0 %2297
      %2299 = vadd.xlane.f32.xlu0 %v2172
      %v2300 = vpop.xlane.xlu0 %2299
      %2301 = vadd.xlane.f32.xlu0 %v2174
      %v2302 = vpop.xlane.xlu0 %2301
      %2303 = vadd.xlane.f32.xlu0 %v2176
      %v2304 = vpop.xlane.xlu0 %2303
      %2305 = vadd.xlane.f32.xlu0 %v2178
      %v2306 = vpop.xlane.xlu0 %2305
      %2307 = vadd.xlane.f32.xlu0 %v2180
      %v2308 = vpop.xlane.xlu0 %2307
      %2309 = vadd.xlane.f32.xlu0 %v2182
      %v2310 = vpop.xlane.xlu0 %2309
      %2311 = vadd.xlane.f32.xlu0 %v2184
      %v2312 = vpop.xlane.xlu0 %2311
      %2313 = vadd.xlane.f32.xlu0 %v2186
      %v2314 = vpop.xlane.xlu0 %2313
      %2315 = vadd.xlane.f32.xlu0 %v2188
      %v2316 = vpop.xlane.xlu0 %2315
      %2317 = vadd.xlane.f32.xlu0 %v2190
      %v2318 = vpop.xlane.xlu0 %2317
      %2319 = vadd.xlane.f32.xlu0 %v2192
      %v2320 = vpop.xlane.xlu0 %2319
      %2321 = vadd.xlane.f32.xlu0 %v2194
      %v2322 = vpop.xlane.xlu0 %2321
      %2323 = vadd.xlane.f32.xlu0 %v2196
      %v2324 = vpop.xlane.xlu0 %2323
      %2325 = vadd.xlane.f32.xlu0 %v2198
      %v2326 = vpop.xlane.xlu0 %2325
      %2327 = vadd.xlane.f32.xlu0 %v2200
      %v2328 = vpop.xlane.xlu0 %2327
      %2329 = vadd.xlane.f32.xlu0 %v2202
      %v2330 = vpop.xlane.xlu0 %2329
      %2331 = vadd.xlane.f32.xlu0 %v2204
      %v2332 = vpop.xlane.xlu0 %2331
      %2333 = vadd.xlane.f32.xlu0 %v2206
      %v2334 = vpop.xlane.xlu0 %2333
      %2335 = vadd.xlane.f32.xlu0 %v2208
      %v2336 = vpop.xlane.xlu0 %2335
      %2337 = vadd.xlane.f32.xlu0 %v2210
      %v2338 = vpop.xlane.xlu0 %2337
      %2339 = vadd.xlane.f32.xlu0 %v2212
      %v2340 = vpop.xlane.xlu0 %2339
      %2341 = vadd.xlane.f32.xlu0 %v2214
      %v2342 = vpop.xlane.xlu0 %2341
      %2343 = vadd.xlane.f32.xlu0 %v2216
      %v2344 = vpop.xlane.xlu0 %2343
      %2345 = vadd.xlane.f32.xlu0 %v2218
      %v2346 = vpop.xlane.xlu0 %2345
      %2347 = vadd.xlane.f32.xlu0 %v2220
      %v2348 = vpop.xlane.xlu0 %2347
      %2349 = vadd.xlane.f32.xlu0 %v2222
      %v2350 = vpop.xlane.xlu0 %2349
      %2351 = vadd.xlane.f32.xlu0 %v2224
      %v2352 = vpop.xlane.xlu0 %2351
      %2353 = vadd.xlane.f32.xlu0 %v2226
      %v2354 = vpop.xlane.xlu0 %2353
      %2355 = vadd.xlane.f32.xlu0 %v2228
      %v2356 = vpop.xlane.xlu0 %2355
      %2357 = vadd.xlane.f32.xlu0 %v2230
      %v2358 = vpop.xlane.xlu0 %2357
      %2359 = vadd.xlane.f32.xlu0 %v2232
      %v2360 = vpop.xlane.xlu0 %2359
      %2361 = vadd.xlane.f32.xlu0 %v2234
      %v2362 = vpop.xlane.xlu0 %2361
      %2363 = vadd.xlane.f32.xlu0 %v2236
      %v2364 = vpop.xlane.xlu0 %2363
      %2365 = vadd.xlane.f32.xlu0 %v2238
      %v2366 = vpop.xlane.xlu0 %2365
      %2367 = vadd.xlane.f32.xlu0 %v2240
      %v2368 = vpop.xlane.xlu0 %2367
      %2369 = vadd.xlane.f32.xlu0 %v2242
      %v2370 = vpop.xlane.xlu0 %2369
      %2371 = vadd.xlane.f32.xlu0 %v2244
      %v2372 = vpop.xlane.xlu0 %2371
      %2373 = vadd.xlane.f32.xlu0 %v2246
      %v2374 = vpop.xlane.xlu0 %2373
      %2375 = vadd.xlane.f32.xlu0 %v2248
      %v2376 = vpop.xlane.xlu0 %2375
      %2377 = vadd.xlane.f32.xlu0 %v2250
      %v2378 = vpop.xlane.xlu0 %2377
      %2379 = vadd.xlane.f32.xlu0 %v2252
      %v2380 = vpop.xlane.xlu0 %2379
      %2381 = vadd.xlane.f32.xlu0 %v2254
      %v2382 = vpop.xlane.xlu0 %2381
      %2383 = vadd.xlane.f32.xlu0 %v2256
      %v2384 = vpop.xlane.xlu0 %2383
      %2385 = vadd.xlane.f32.xlu0 %v2258
      %v2386 = vpop.xlane.xlu0 %2385
      %2387 = vadd.xlane.f32.xlu0 %v2260
      %v2388 = vpop.xlane.xlu0 %2387
      %2389 = vadd.xlane.f32.xlu0 %v2262
      %v2390 = vpop.xlane.xlu0 %2389
      %2391 = vadd.xlane.f32.xlu0 %v2264
      %v2392 = vpop.xlane.xlu0 %2391
      %2393 = vadd.xlane.f32.xlu0 %v2266
      %v2394 = vpop.xlane.xlu0 %2393
      %2395 = vadd.xlane.f32.xlu0 %v2268
      %v2396 = vpop.xlane.xlu0 %2395
      %v2397 = vrcp.pop %v2270
      %v2398 = vrcp.pop %v2272
      %v2399 = vrcp.pop %v2274
      %v2400 = vrcp.pop %v2276
      %v2401 = vrcp.pop %v2278
      %v2402 = vrcp.pop %v2280
      %v2403 = vrcp.pop %v2282
      %v2404 = vrcp.pop %v2284
      %v2405 = vrcp.pop %v2286
      %v2406 = vrcp.pop %v2288
      %v2407 = vrcp.pop %v2290
      %v2408 = vrcp.pop %v2292
      %v2409 = vrcp.pop %v2294
      %v2410 = vrcp.pop %v2296
      %v2411 = vrcp.pop %v2298
      %v2412 = vrcp.pop %v2300
      %v2413 = vrcp.pop %v2302
      %v2414 = vrcp.pop %v2304
      %v2415 = vrcp.pop %v2306
      %v2416 = vrcp.pop %v2308
      %v2417 = vrcp.pop %v2310
      %v2418 = vrcp.pop %v2312
      %v2419 = vrcp.pop %v2314
      %v2420 = vrcp.pop %v2316
      %v2421 = vrcp.pop %v2318
      %v2422 = vrcp.pop %v2320
      %v2423 = vrcp.pop %v2322
      %v2424 = vrcp.pop %v2324
      %v2425 = vrcp.pop %v2326
      %v2426 = vrcp.pop %v2328
      %v2427 = vrcp.pop %v2330
      %v2428 = vrcp.pop %v2332
      %v2429 = vrcp.pop %v2334
      %v2430 = vrcp.pop %v2336
      %v2431 = vrcp.pop %v2338
      %v2432 = vrcp.pop %v2340
      %v2433 = vrcp.pop %v2342
      %v2434 = vrcp.pop %v2344
      %v2435 = vrcp.pop %v2346
      %v2436 = vrcp.pop %v2348
      %v2437 = vrcp.pop %v2350
      %v2438 = vrcp.pop %v2352
      %v2439 = vrcp.pop %v2354
      %v2440 = vrcp.pop %v2356
      %v2441 = vrcp.pop %v2358
      %v2442 = vrcp.pop %v2360
      %v2443 = vrcp.pop %v2362
      %v2444 = vrcp.pop %v2364
      %v2445 = vrcp.pop %v2366
      %v2446 = vrcp.pop %v2368
      %v2447 = vrcp.pop %v2370
      %v2448 = vrcp.pop %v2372
      %v2449 = vrcp.pop %v2374
      %v2450 = vrcp.pop %v2376
      %v2451 = vrcp.pop %v2378
      %v2452 = vrcp.pop %v2380
      %v2453 = vrcp.pop %v2382
      %v2454 = vrcp.pop %v2384
      %v2455 = vrcp.pop %v2386
      %v2456 = vrcp.pop %v2388
      %v2457 = vrcp.pop %v2390
      %v2458 = vrcp.pop %v2392
      %v2459 = vrcp.pop %v2394
      %v2460 = vrcp.pop %v2396
      %v2461 = vmul.f32 %v2142, %v2397
      %v2462 = vmul.f32 %v2144, %v2398
      %v2463 = vmul.f32 %v2146, %v2399
      %v2464 = vmul.f32 %v2148, %v2400
      %v2465 = vmul.f32 %v2150, %v2401
      %v2466 = vmul.f32 %v2152, %v2402
      %v2467 = vmul.f32 %v2154, %v2403
      %v2468 = vmul.f32 %v2156, %v2404
      %v2469 = vmul.f32 %v2158, %v2405
      %v2470 = vmul.f32 %v2160, %v2406
      %v2471 = vmul.f32 %v2162, %v2407
      %v2472 = vmul.f32 %v2164, %v2408
      %v2473 = vmul.f32 %v2166, %v2409
      %v2474 = vmul.f32 %v2168, %v2410
      %v2475 = vmul.f32 %v2170, %v2411
      %v2476 = vmul.f32 %v2172, %v2412
      %v2477 = vmul.f32 %v2174, %v2413
      %v2478 = vmul.f32 %v2176, %v2414
      %v2479 = vmul.f32 %v2178, %v2415
      %v2480 = vmul.f32 %v2180, %v2416
      %v2481 = vmul.f32 %v2182, %v2417
      %v2482 = vmul.f32 %v2184, %v2418
      %v2483 = vmul.f32 %v2186, %v2419
      %v2484 = vmul.f32 %v2188, %v2420
      %v2485 = vmul.f32 %v2190, %v2421
      %v2486 = vmul.f32 %v2192, %v2422
      %v2487 = vmul.f32 %v2194, %v2423
      %v2488 = vmul.f32 %v2196, %v2424
      %v2489 = vmul.f32 %v2198, %v2425
      %v2490 = vmul.f32 %v2200, %v2426
      %v2491 = vmul.f32 %v2202, %v2427
      %v2492 = vmul.f32 %v2204, %v2428
      %v2493 = vmul.f32 %v2206, %v2429
      %v2494 = vmul.f32 %v2208, %v2430
      %v2495 = vmul.f32 %v2210, %v2431
      %v2496 = vmul.f32 %v2212, %v2432
      %v2497 = vmul.f32 %v2214, %v2433
      %v2498 = vmul.f32 %v2216, %v2434
      %v2499 = vmul.f32 %v2218, %v2435
      %v2500 = vmul.f32 %v2220, %v2436
      %v2501 = vmul.f32 %v2222, %v2437
      %v2502 = vmul.f32 %v2224, %v2438
      %v2503 = vmul.f32 %v2226, %v2439
      %v2504 = vmul.f32 %v2228, %v2440
      %v2505 = vmul.f32 %v2230, %v2441
      %v2506 = vmul.f32 %v2232, %v2442
      %v2507 = vmul.f32 %v2234, %v2443
      %v2508 = vmul.f32 %v2236, %v2444
      %v2509 = vmul.f32 %v2238, %v2445
      %v2510 = vmul.f32 %v2240, %v2446
      %v2511 = vmul.f32 %v2242, %v2447
      %v2512 = vmul.f32 %v2244, %v2448
      %v2513 = vmul.f32 %v2246, %v2449
      %v2514 = vmul.f32 %v2248, %v2450
      %v2515 = vmul.f32 %v2250, %v2451
      %v2516 = vmul.f32 %v2252, %v2452
      %v2517 = vmul.f32 %v2254, %v2453
      %v2518 = vmul.f32 %v2256, %v2454
      %v2519 = vmul.f32 %v2258, %v2455
      %v2520 = vmul.f32 %v2260, %v2456
      %v2521 = vmul.f32 %v2262, %v2457
      %v2522 = vmul.f32 %v2264, %v2458
      %v2523 = vmul.f32 %v2266, %v2459
      %v2524 = vmul.f32 %v2268, %v2460
      %2525 = vst [vmem:[%s280] sm:$0xff] %v2461
      %2526 = vst [vmem:[%s280 + $0x8] sm:$0xff] %v2462
      %2527 = vst [vmem:[%s280 + $0x10] sm:$0xff] %v2463
      %2528 = vst [vmem:[%s280 + $0x18] sm:$0xff] %v2464
      %2529 = vst [vmem:[%s280 + $0x20] sm:$0xff] %v2465
      %2530 = vst [vmem:[%s280 + $0x28] sm:$0xff] %v2466
      %2531 = vst [vmem:[%s280 + $0x30] sm:$0xff] %v2467
      %2532 = vst [vmem:[%s280 + $0x38] sm:$0xff] %v2468
      %2533 = vst [vmem:[%s280 + $0x40] sm:$0xff] %v2469
      %2534 = vst [vmem:[%s280 + $0x48] sm:$0xff] %v2470
      %2535 = vst [vmem:[%s280 + $0x50] sm:$0xff] %v2471
      %2536 = vst [vmem:[%s280 + $0x58] sm:$0xff] %v2472
      %2537 = vst [vmem:[%s280 + $0x60] sm:$0xff] %v2473
      %2538 = vst [vmem:[%s280 + $0x68] sm:$0xff] %v2474
      %2539 = vst [vmem:[%s280 + $0x70] sm:$0xff] %v2475
      %2540 = vst [vmem:[%s280 + $0x78] sm:$0xff] %v2476
      %2541 = vst [vmem:[%s280 + $0x80] sm:$0xff] %v2477
      %2542 = vst [vmem:[%s280 + $0x88] sm:$0xff] %v2478
      %2543 = vst [vmem:[%s280 + $0x90] sm:$0xff] %v2479
      %2544 = vst [vmem:[%s280 + $0x98] sm:$0xff] %v2480
      %2545 = vst [vmem:[%s280 + $0xa0] sm:$0xff] %v2481
      %2546 = vst [vmem:[%s280 + $0xa8] sm:$0xff] %v2482
      %2547 = vst [vmem:[%s280 + $0xb0] sm:$0xff] %v2483
      %2548 = vst [vmem:[%s280 + $0xb8] sm:$0xff] %v2484
      %2549 = vst [vmem:[%s280 + $0xc0] sm:$0xff] %v2485
      %2550 = vst [vmem:[%s280 + $0xc8] sm:$0xff] %v2486
      %2551 = vst [vmem:[%s280 + $0xd0] sm:$0xff] %v2487
      %2552 = vst [vmem:[%s280 + $0xd8] sm:$0xff] %v2488
      %2553 = vst [vmem:[%s280 + $0xe0] sm:$0xff] %v2489
      %2554 = vst [vmem:[%s280 + $0xe8] sm:$0xff] %v2490
      %2555 = vst [vmem:[%s280 + $0xf0] sm:$0xff] %v2491
      %2556 = vst [vmem:[%s280 + $0xf8] sm:$0xff] %v2492
      %2557 = vst [vmem:[%s280 + $0x100] sm:$0xff] %v2493
      %2558 = vst [vmem:[%s280 + $0x108] sm:$0xff] %v2494
      %2559 = vst [vmem:[%s280 + $0x110] sm:$0xff] %v2495
      %2560 = vst [vmem:[%s280 + $0x118] sm:$0xff] %v2496
      %2561 = vst [vmem:[%s280 + $0x120] sm:$0xff] %v2497
      %2562 = vst [vmem:[%s280 + $0x128] sm:$0xff] %v2498
      %2563 = vst [vmem:[%s280 + $0x130] sm:$0xff] %v2499
      %2564 = vst [vmem:[%s280 + $0x138] sm:$0xff] %v2500
      %2565 = vst [vmem:[%s280 + $0x140] sm:$0xff] %v2501
      %2566 = vst [vmem:[%s280 + $0x148] sm:$0xff] %v2502
      %2567 = vst [vmem:[%s280 + $0x150] sm:$0xff] %v2503
      %2568 = vst [vmem:[%s280 + $0x158] sm:$0xff] %v2504
      %2569 = vst [vmem:[%s280 + $0x160] sm:$0xff] %v2505
      %2570 = vst [vmem:[%s280 + $0x168] sm:$0xff] %v2506
      %2571 = vst [vmem:[%s280 + $0x170] sm:$0xff] %v2507
      %2572 = vst [vmem:[%s280 + $0x178] sm:$0xff] %v2508
      %2573 = vst [vmem:[%s280 + $0x180] sm:$0xff] %v2509
      %2574 = vst [vmem:[%s280 + $0x188] sm:$0xff] %v2510
      %2575 = vst [vmem:[%s280 + $0x190] sm:$0xff] %v2511
      %2576 = vst [vmem:[%s280 + $0x198] sm:$0xff] %v2512
      %2577 = vst [vmem:[%s280 + $0x1a0] sm:$0xff] %v2513
      %2578 = vst [vmem:[%s280 + $0x1a8] sm:$0xff] %v2514
      %2579 = vst [vmem:[%s280 + $0x1b0] sm:$0xff] %v2515
      %2580 = vst [vmem:[%s280 + $0x1b8] sm:$0xff] %v2516
      %2581 = vst [vmem:[%s280 + $0x1c0] sm:$0xff] %v2517
      %2582 = vst [vmem:[%s280 + $0x1c8] sm:$0xff] %v2518
      %2583 = vst [vmem:[%s280 + $0x1d0] sm:$0xff] %v2519
      %2584 = vst [vmem:[%s280 + $0x1d8] sm:$0xff] %v2520
      %2585 = vst [vmem:[%s280 + $0x1e0] sm:$0xff] %v2521
      %2586 = vst [vmem:[%s280 + $0x1e8] sm:$0xff] %v2522
      %2587 = vst [vmem:[%s280 + $0x1f0] sm:$0xff] %v2523
      %2588 = vst [vmem:[%s280 + $0x1f8] sm:$0xff] %v2524
      %s2589 = smul.u32 64, %s18
      %p2590 = scmp.lt.s32.totalorder %s2589, 127
      %s2591 = scalar_select %p2590, %s2589, 127
      %s2592 = smul.addr %s2591, 8
      %s2593 = scalar_lea.vmem %s7, %s2592
      // Predicated region
      $region49: #{actor_mlp_forward.1} parent=47 // pred_check
        %p2594 = pneg %p188
      $region50: #{actor_mlp_forward.1} parent=47 // pred_check_branch
        %2596 = sbr.rel (%p2594) target = $region52
      $region51: #{actor_mlp_forward.1} parent=47 // pred_region
        %s2597 = smul.u32 64, %s18
      $region52: #{actor_mlp_forward.1} parent=47 // pred_fallthru
        _
    $region48: #{actor_mlp_forward.1} parent=5 // pred_fallthru
      _
    %p2598 = scmp.le.s32.totalorder 2, %s13
    // Predicated region
    $region53: #{actor_mlp_forward.1} parent=5 // pred_check
      %p2599 = pneg %p2598
    $region54: #{actor_mlp_forward.1} parent=5 // pred_check_branch
      %2601 = sbr.rel (%p2599) target = $region56
    $region55: #{actor_mlp_forward.1} parent=5 // pred_region
      %s2602 = ssub.s32 %s13, 2
      // Predicated region
      $region57: #{actor_mlp_forward.1} parent=55 // pred_check
        %p2603 = pneg %p194
      $region58: #{actor_mlp_forward.1} parent=55 // pred_check_branch
        %2605 = sbr.rel (%p2603) target = $region60
      $region59: #{actor_mlp_forward.1} parent=55 // pred_region
        %s2606 = smul.u32 64, %s19
        %p2607 = scmp.lt.s32.totalorder %s2606, 127
        %s2608 = scalar_select %p2607, %s2606, 127
        %s2609 = smul.addr %s2608, 8
        %s2610 = scalar_lea.vmem %s7, %s2609
      $region60: #{actor_mlp_forward.1} parent=55 // pred_fallthru
        _
    $region56: #{actor_mlp_forward.1} parent=5 // pred_fallthru
      _
  $region6: #{actor_mlp_forward.1} parent=0 // loop_footer
    %s17 = sadd.s32 1, %s13
  $region7: #{actor_mlp_forward.1} parent=0 // loop_footer_branch
    %12 = sbr.rel target = $region3
  $region8: #{actor_mlp_forward.1} parent=0 // loop_exit
    _

</llo_original>
